<compile_context>
chip_gen: v7x
topology: tpu7x:2x2x1
jax: 0.10.0
libtpu: 0.0.40
codegen_flags: <defaults>
</compile_context>

<pallas_src>
import jax
import jax.numpy as jnp
from jax import lax
from jax.experimental import pallas as pl
from jax.experimental.pallas import tpu as pltpu

LANE = 128


def _round_up(v, m):
    return ((v + m - 1) // m) * m


def _bottleneck_kernel(x_ref, w1_ref, w2_ref, w3_ref, o_ref, pad_ref):
    # x_ref:  (1, H, W, Cp)    bf16  full image (block index constant over the row axis,
    #                                so it is DMA'd once per image, not once per block)
    # w1_ref: (Cp, Pp)         bf16  conv1 1x1 weight (resident in VMEM, single copy)
    # w2_ref: (3, 3*Pp, Pp)    bf16  conv2 3x3 weight; row ky holds the (kx,cin)-flat taps
    # w3_ref: (Pp, Cp)         bf16  conv3 1x1 weight
    # o_ref:  (1, RB, W, Cp)   bf16  one row block of the output
    # pad_ref:(H+2, W, 3*Pp)   bf16  persistent row-im2col scratch:
    #                                pad_ref[y, x, kx*Pp + c] = relu(conv1(x))_pad[y, x+kx, c]
    _, H, W, Cp = x_ref.shape
    _, RB, _, _ = o_ref.shape
    Pp = w1_ref.shape[1]
    r = pl.program_id(1)
    row0 = r * RB

    # --- conv1 (1x1) + ReLU for the whole image, done once per image (r == 0); the
    #     scratch persists across this image's row-block steps (re-done per image, so
    #     it stays correct when the "parallel" batch axis is split across TensorCores).
    @pl.when(r == 0)
    def _():
        x2d = x_ref[0].reshape(H * W, Cp)                                   # bf16, free reshape
        h1 = jnp.dot(x2d, w1_ref[...], preferred_element_type=jnp.float32)
        h1 = jnp.maximum(h1, 0.0).astype(pad_ref.dtype).reshape(H, W, Pp)   # (H, W, Pp) bf16
        # Three kx-shifted copies side by side on the lane axis (offsets are multiples
        # of 128 -> aligned stores/reads).  The shifted copies carry the left/right zero
        # border, so no separate column zeroing is needed.
        # TODO(synk): the two column shifts could also ride the XLU via pltpu.roll+mask.
        zc = jnp.zeros((H, 1, Pp), dtype=pad_ref.dtype)
        slab = jnp.concatenate(
            [jnp.concatenate([zc, h1[:, :W - 1, :]], axis=1),   # kx = 0 -> h1_pad[:, x-1]
             h1,                                                # kx = 1 -> h1_pad[:, x  ]
             jnp.concatenate([h1[:, 1:, :], zc], axis=1)],      # kx = 2 -> h1_pad[:, x+1]
            axis=2)                                             # (H, W, 3*Pp)
        pad_ref[1:H + 1, :, :] = slab
        zrow = jnp.zeros((1, W, 3 * Pp), dtype=pad_ref.dtype)
        pad_ref[0:1, :, :] = zrow                               # top zero-padding row
        pad_ref[H + 1:H + 2, :, :] = zrow                       # bottom zero-padding row

    # --- conv2 (3x3, stride 1, pad 1): three ky-group dots, K = 3*Pp, f32 accumulate.
    MB = RB * W
    h2 = jnp.dot(pad_ref[pl.ds(row0 + 0, RB), :, :].reshape(MB, 3 * Pp), w2_ref[0],
                 preferred_element_type=jnp.float32)
    h2 += jnp.dot(pad_ref[pl.ds(row0 + 1, RB), :, :].reshape(MB, 3 * Pp), w2_ref[1],
                  preferred_element_type=jnp.float32)
    h2 += jnp.dot(pad_ref[pl.ds(row0 + 2, RB), :, :].reshape(MB, 3 * Pp), w2_ref[2],
                  preferred_element_type=jnp.float32)
    h2 = jnp.maximum(h2, 0.0).astype(w3_ref.dtype)              # (MB, Pp) bf16

    # --- conv3 (1x1 expansion) + identity residual + final ReLU (f32 epilogue). ----
    h3 = jnp.dot(h2, w3_ref[...], preferred_element_type=jnp.float32)
    xb = x_ref[0, pl.ds(row0, RB), :, :].reshape(MB, Cp).astype(jnp.float32)
    out = jnp.maximum(h3 + xb, 0.0)                             # (MB, Cp) f32
    o_ref[0] = out.reshape(RB, W, Cp).astype(o_ref.dtype)       # lane-dense bf16 store


def bottleneck_no_bn(x_nchw, w1, w2, w3, *, compute_dtype=jnp.bfloat16, row_block=None):
    """BottleneckNoBn forward (stride=1, downsample=None).

    x_nchw: (N, Cin, H, W); w1: (Cin, P); w2: (3, 3, P, P) HWIO; w3: (P, 4P).
    MXU operands run in `compute_dtype` with f32 accumulation; output is computed in
    compute_dtype and cast back to x's dtype at the boundary.
    """
    N, Cin, H, W = x_nchw.shape
    P = w1.shape[1]
    Cout = w3.shape[1]
    assert Cout == Cin, "identity residual requires inplanes == planes * expansion"

    Cp = _round_up(max(Cin, LANE), LANE)   # padded in/out channels (lane-dense)
    Pp = _round_up(max(P, LANE), LANE)     # padded bottleneck width

    # Row-block size: prefer >=2 blocks per image for pipeline depth while keeping
    # M = row_block * W per dot large enough to amortize MXU push/drain.
    if row_block is None:
        row_block = H
        for rb in (8, 16, 7, 4, 2):
            if H % rb == 0 and rb < H and rb * W >= 128:
                row_block = rb
                break
    assert H % row_block == 0
    n_row_blocks = H // row_block

    # Glue: cast to bf16 FIRST so the transpose/pad HLOs move half the bytes, then
    # NCHW -> NHWC and zero-pad channels (zero padding keeps the math exact).
    x = x_nchw.astype(compute_dtype)
    x = jnp.transpose(x, (0, 2, 3, 1))
    x = jnp.pad(x, ((0, 0), (0, 0), (0, 0), (0, Cp - Cin)))

    w1_p = jnp.pad(w1, ((0, Cp - Cin), (0, Pp - P))).astype(compute_dtype)
    w2_p = jnp.pad(w2, ((0, 0), (0, 0), (0, Pp - P), (0, Pp - P))).astype(compute_dtype)
    w2_p = w2_p.reshape(3, 3 * Pp, Pp)     # row ky holds taps flattened as kx*Pp + cin
    w3_p = jnp.pad(w3, ((0, Pp - P), (0, Cp - Cout))).astype(compute_dtype)

    out_nhwc = pl.pallas_call(
        _bottleneck_kernel,
        out_shape=jax.ShapeDtypeStruct((N, H, W, Cp), compute_dtype),
        grid_spec=pltpu.PrefetchScalarGridSpec(
            num_scalar_prefetch=0,
            grid=(N, n_row_blocks),
            in_specs=[
                pl.BlockSpec((1, H, W, Cp), lambda n, r: (n, 0, 0, 0)),
                pl.BlockSpec(memory_space=pltpu.MemorySpace.VMEM),   # w1 (single copy)
                pl.BlockSpec(memory_space=pltpu.MemorySpace.VMEM),   # w2 (single copy)
                pl.BlockSpec(memory_space=pltpu.MemorySpace.VMEM),   # w3 (single copy)
            ],
            out_specs=pl.BlockSpec((1, row_block, W, Cp), lambda n, r: (n, r, 0, 0)),
            scratch_shapes=[pltpu.VMEM((H + 2, W, 3 * Pp), compute_dtype)],
        ),
        compiler_params=pltpu.CompilerParams(
            dimension_semantics=("parallel", "arbitrary"),
            vmem_limit_bytes=32 * 1024 * 1024,
        ),
    )(x, w1_p, w2_p, w3_p)

    out_nhwc = out_nhwc[..., :Cout]
    # TODO(synk): drop the NHWC->NCHW transpose (and the channel slice) if the
    #             surrounding model carries NHWC / padded channels end-to-end.
    return jnp.transpose(out_nhwc, (0, 3, 1, 2)).astype(x_nchw.dtype)


def _reference(x_nchw, w1, w2, w3, compute_dtype=jnp.bfloat16):
    """Pure-JAX reference mirroring the PyTorch forward (NCHW / OIHW convs), with the
    same bf16-operand / f32-accumulate numerics as the kernel."""
    dn = ("NCHW", "OIHW", "NCHW")
    cd = compute_dtype
    xq = x_nchw.astype(cd)
    w1_oihw = jnp.transpose(w1).astype(cd)[:, :, None, None]        # (P, Cin, 1, 1)
    w2_oihw = jnp.transpose(w2, (3, 2, 0, 1)).astype(cd)            # (P, P, 3, 3)
    w3_oihw = jnp.transpose(w3).astype(cd)[:, :, None, None]        # (Cout, P, 1, 1)
    h = lax.conv_general_dilated(xq, w1_oihw, (1, 1), "VALID", dimension_numbers=dn,
                                 preferred_element_type=jnp.float32)
    h = jnp.maximum(h, 0.0).astype(cd)
    h = lax.conv_general_dilated(h, w2_oihw, (1, 1), ((1, 1), (1, 1)), dimension_numbers=dn,
                                 preferred_element_type=jnp.float32)
    h = jnp.maximum(h, 0.0).astype(cd)
    h = lax.conv_general_dilated(h, w3_oihw, (1, 1), "VALID", dimension_numbers=dn,
                                 preferred_element_type=jnp.float32)
    return jnp.maximum(h + xq.astype(jnp.float32), 0.0)


if __name__ == "__main__":
    # Small shapes: planes=4, expansion=4 -> inplanes = Cout = 16 (identity residual valid).
    N, planes, expansion, H, W = 2, 4, 4, 16, 16
    Cin = planes * expansion
    Cout = planes * expansion

    key = jax.random.PRNGKey(0)
    k_x, k1, k2, k3 = jax.random.split(key, 4)
    x = jax.random.normal(k_x, (N, Cin, H, W), dtype=jnp.float32)
    # Deterministic synthetic weights (shapes from the module __init__, bias=False).
    w1 = jax.random.normal(k1, (Cin, planes), dtype=jnp.float32) * 0.1            # conv1 1x1
    w2 = jax.random.normal(k2, (3, 3, planes, planes), dtype=jnp.float32) * 0.1   # conv2 3x3 (HWIO)
    w3 = jax.random.normal(k3, (planes, Cout), dtype=jnp.float32) * 0.1           # conv3 1x1

    out = bottleneck_no_bn(x, w1, w2, w3)
    out = jax.block_until_ready(out)

    ref = _reference(x, w1, w2, w3)
    assert out.shape == ref.shape == (N, Cout, H, W)
    # bf16 operands / f32 accumulation on both sides, bf16-rounded kernel output;
    # tolerance covers the output rounding plus accumulation-order differences.
    assert jnp.allclose(out, ref, rtol=2e-2, atol=2e-2), "mismatch vs reference"
    print("KERNEL_OK")
</pallas_src>

<mosaic_0001>
module attributes {stable_mosaic.version = 11 : i64} {
  func.func @_bottleneck_kernel(%arg0: i32, %arg1: i32, %arg2: memref<1x16x16x128xbf16, #tpu.memory_space<vmem>>, %arg3: memref<128x128xbf16, #tpu.memory_space<vmem>>, %arg4: memref<3x384x128xbf16, #tpu.memory_space<vmem>>, %arg5: memref<128x128xbf16, #tpu.memory_space<vmem>>, %arg6: memref<1x8x16x128xbf16, #tpu.memory_space<vmem>>, %arg7: memref<18x16x384xbf16, #tpu.memory_space<vmem>>) attributes {dimension_semantics = [#tpu.dimension_semantics<parallel>, #tpu.dimension_semantics<arbitrary>], iteration_bounds = array<i64: 2, 2>, scalar_prefetch = 0 : i64, scratch_operands = 1 : i64, tpu.core_type = #tpu.core_type<tc>, window_params = [{transform_indices = @transform_0, window_bounds = array<i64: 1, 16, 16, 128>}, {pipeline_mode = #tpu.pipeline_mode<synchronous>, transform_indices = @transform_1, window_bounds = array<i64: 128, 128>}, {pipeline_mode = #tpu.pipeline_mode<synchronous>, transform_indices = @transform_2, window_bounds = array<i64: 3, 384, 128>}, {pipeline_mode = #tpu.pipeline_mode<synchronous>, transform_indices = @transform_3, window_bounds = array<i64: 128, 128>}, {transform_indices = @transform_4, window_bounds = array<i64: 1, 8, 16, 128>}]} {
    %c8_i32 = arith.constant 8 : i32
    %0 = arith.muli %arg1, %c8_i32 : i32
    %c0_i32 = arith.constant 0 : i32
    %1 = arith.cmpi eq, %arg1, %c0_i32 : i32
    %2 = arith.extui %1 : i1 to i32
    %c0_i32_0 = arith.constant 0 : i32
    %3 = arith.cmpi ne, %2, %c0_i32_0 : i32
    scf.if %3 {
      %c0_28 = arith.constant 0 : index
      %c0_29 = arith.constant 0 : index
      %c0_30 = arith.constant 0 : index
      %c0_31 = arith.constant 0 : index
      %45 = vector.load %arg2[%c0_28, %c0_29, %c0_30, %c0_31] : memref<1x16x16x128xbf16, #tpu.memory_space<vmem>>, vector<1x16x16x128xbf16>
      %46 = vector.shape_cast %45 : vector<1x16x16x128xbf16> to vector<16x16x128xbf16>
      %47 = vector.shape_cast %46 : vector<16x16x128xbf16> to vector<256x128xbf16>
      %c0_32 = arith.constant 0 : index
      %c0_33 = arith.constant 0 : index
      %48 = vector.load %arg3[%c0_32, %c0_33] : memref<128x128xbf16, #tpu.memory_space<vmem>>, vector<128x128xbf16>
      %cst_34 = arith.constant dense<0.000000e+00> : vector<256x128xf32>
      %49 = tpu.matmul %47, %48, %cst_34 {dimension_numbers = #tpu.dot_dimension_numbers<[1], [0], [0], [1], [0, 0, 1, 1], [], []>} : vector<256x128xbf16>, vector<128x128xbf16>, vector<256x128xf32> -> vector<256x128xf32>
      %cst_35 = arith.constant 0.000000e+00 : f32
      %50 = vector.broadcast %cst_35 : f32 to vector<256x128xf32>
      %51 = arith.maximumf %49, %50 : vector<256x128xf32>
      %52 = arith.truncf %51 : vector<256x128xf32> to vector<256x128xbf16>
      %53 = vector.shape_cast %52 : vector<256x128xbf16> to vector<16x16x128xbf16>
      %cst_36 = arith.constant 0.000000e+00 : bf16
      %54 = vector.broadcast %cst_36 : bf16 to vector<16x1x128xbf16>
      %55 = vector.extract_strided_slice %53 {offsets = [0, 0, 0], sizes = [16, 15, 128], strides = [1, 1, 1]} : vector<16x16x128xbf16> to vector<16x15x128xbf16>
      %56 = tpu.concatenate %54, %55 in 1 : vector<16x1x128xbf16>, vector<16x15x128xbf16> -> vector<16x16x128xbf16>
      %57 = vector.extract_strided_slice %53 {offsets = [0, 1, 0], sizes = [16, 15, 128], strides = [1, 1, 1]} : vector<16x16x128xbf16> to vector<16x15x128xbf16>
      %58 = tpu.concatenate %57, %54 in 1 : vector<16x15x128xbf16>, vector<16x1x128xbf16> -> vector<16x16x128xbf16>
      %59 = tpu.concatenate %56, %53, %58 in 2 : vector<16x16x128xbf16>, vector<16x16x128xbf16>, vector<16x16x128xbf16> -> vector<16x16x384xbf16>
      %c1_37 = arith.constant 1 : index
      %c0_38 = arith.constant 0 : index
      %c0_39 = arith.constant 0 : index
      %60 = vector.load %arg7[%c1_37, %c0_38, %c0_39] : memref<18x16x384xbf16, #tpu.memory_space<vmem>>, vector<16x16x384xbf16>
      tpu.vector_store %arg7[%c1_37, %c0_38, %c0_39], %59 {strides = array<i32>} : memref<18x16x384xbf16, #tpu.memory_space<vmem>>, vector<16x16x384xbf16>,
      %cst_40 = arith.constant 0.000000e+00 : bf16
      %61 = vector.broadcast %cst_40 : bf16 to vector<1x16x384xbf16>
      %c0_41 = arith.constant 0 : index
      %c0_42 = arith.constant 0 : index
      %c0_43 = arith.constant 0 : index
      %62 = vector.load %arg7[%c0_41, %c0_42, %c0_43] : memref<18x16x384xbf16, #tpu.memory_space<vmem>>, vector<1x16x384xbf16>
      tpu.vector_store %arg7[%c0_41, %c0_42, %c0_43], %61 {strides = array<i32>} : memref<18x16x384xbf16, #tpu.memory_space<vmem>>, vector<1x16x384xbf16>,
      %c17 = arith.constant 17 : index
      %c0_44 = arith.constant 0 : index
      %c0_45 = arith.constant 0 : index
      %63 = vector.load %arg7[%c17, %c0_44, %c0_45] : memref<18x16x384xbf16, #tpu.memory_space<vmem>>, vector<1x16x384xbf16>
      tpu.vector_store %arg7[%c17, %c0_44, %c0_45], %61 {strides = array<i32>} : memref<18x16x384xbf16, #tpu.memory_space<vmem>>, vector<1x16x384xbf16>,
    } else {
    }
    %c0_i32_1 = arith.constant 0 : i32
    %4 = arith.addi %0, %c0_i32_1 : i32
    %5 = arith.index_cast %4 : i32 to index
    %c0 = arith.constant 0 : index
    %c0_2 = arith.constant 0 : index
    %6 = vector.load %arg7[%5, %c0, %c0_2] : memref<18x16x384xbf16, #tpu.memory_space<vmem>>, vector<8x16x384xbf16>
    %7 = vector.shape_cast %6 : vector<8x16x384xbf16> to vector<128x384xbf16>
    %c0_3 = arith.constant 0 : index
    %c0_4 = arith.constant 0 : index
    %c0_5 = arith.constant 0 : index
    %8 = vector.load %arg4[%c0_3, %c0_4, %c0_5] : memref<3x384x128xbf16, #tpu.memory_space<vmem>>, vector<1x384x128xbf16>
    %9 = vector.shape_cast %8 : vector<1x384x128xbf16> to vector<384x128xbf16>
    %cst = arith.constant dense<0.000000e+00> : vector<128x128xf32>
    %10 = tpu.matmul %7, %9, %cst {dimension_numbers = #tpu.dot_dimension_numbers<[1], [0], [0], [1], [0, 0, 1, 1], [], []>} : vector<128x384xbf16>, vector<384x128xbf16>, vector<128x128xf32> -> vector<128x128xf32>
    %c1_i32 = arith.constant 1 : i32
    %11 = arith.addi %0, %c1_i32 : i32
    %12 = arith.index_cast %11 : i32 to index
    %c0_6 = arith.constant 0 : index
    %c0_7 = arith.constant 0 : index
    %13 = vector.load %arg7[%12, %c0_6, %c0_7] : memref<18x16x384xbf16, #tpu.memory_space<vmem>>, vector<8x16x384xbf16>
    %14 = vector.shape_cast %13 : vector<8x16x384xbf16> to vector<128x384xbf16>
    %c1 = arith.constant 1 : index
    %c0_8 = arith.constant 0 : index
    %c0_9 = arith.constant 0 : index
    %15 = vector.load %arg4[%c1, %c0_8, %c0_9] : memref<3x384x128xbf16, #tpu.memory_space<vmem>>, vector<1x384x128xbf16>
    %16 = vector.shape_cast %15 : vector<1x384x128xbf16> to vector<384x128xbf16>
    %cst_10 = arith.constant dense<0.000000e+00> : vector<128x128xf32>
    %17 = tpu.matmul %14, %16, %cst_10 {dimension_numbers = #tpu.dot_dimension_numbers<[1], [0], [0], [1], [0, 0, 1, 1], [], []>} : vector<128x384xbf16>, vector<384x128xbf16>, vector<128x128xf32> -> vector<128x128xf32>
    %18 = arith.addf %10, %17 : vector<128x128xf32>
    %c2_i32 = arith.constant 2 : i32
    %19 = arith.addi %0, %c2_i32 : i32
    %20 = arith.index_cast %19 : i32 to index
    %c0_11 = arith.constant 0 : index
    %c0_12 = arith.constant 0 : index
    %21 = vector.load %arg7[%20, %c0_11, %c0_12] : memref<18x16x384xbf16, #tpu.memory_space<vmem>>, vector<8x16x384xbf16>
    %22 = vector.shape_cast %21 : vector<8x16x384xbf16> to vector<128x384xbf16>
    %c2 = arith.constant 2 : index
    %c0_13 = arith.constant 0 : index
    %c0_14 = arith.constant 0 : index
    %23 = vector.load %arg4[%c2, %c0_13, %c0_14] : memref<3x384x128xbf16, #tpu.memory_space<vmem>>, vector<1x384x128xbf16>
    %24 = vector.shape_cast %23 : vector<1x384x128xbf16> to vector<384x128xbf16>
    %cst_15 = arith.constant dense<0.000000e+00> : vector<128x128xf32>
    %25 = tpu.matmul %22, %24, %cst_15 {dimension_numbers = #tpu.dot_dimension_numbers<[1], [0], [0], [1], [0, 0, 1, 1], [], []>} : vector<128x384xbf16>, vector<384x128xbf16>, vector<128x128xf32> -> vector<128x128xf32>
    %26 = arith.addf %18, %25 : vector<128x128xf32>
    %cst_16 = arith.constant 0.000000e+00 : f32
    %27 = vector.broadcast %cst_16 : f32 to vector<128x128xf32>
    %28 = arith.maximumf %26, %27 : vector<128x128xf32>
    %29 = arith.truncf %28 : vector<128x128xf32> to vector<128x128xbf16>
    %c0_17 = arith.constant 0 : index
    %c0_18 = arith.constant 0 : index
    %30 = vector.load %arg5[%c0_17, %c0_18] : memref<128x128xbf16, #tpu.memory_space<vmem>>, vector<128x128xbf16>
    %cst_19 = arith.constant dense<0.000000e+00> : vector<128x128xf32>
    %31 = tpu.matmul %29, %30, %cst_19 {dimension_numbers = #tpu.dot_dimension_numbers<[1], [0], [0], [1], [0, 0, 1, 1], [], []>} : vector<128x128xbf16>, vector<128x128xbf16>, vector<128x128xf32> -> vector<128x128xf32>
    %c0_20 = arith.constant 0 : index
    %32 = arith.index_cast %0 : i32 to index
    %c0_21 = arith.constant 0 : index
    %c0_22 = arith.constant 0 : index
    %33 = vector.load %arg2[%c0_20, %32, %c0_21, %c0_22] : memref<1x16x16x128xbf16, #tpu.memory_space<vmem>>, vector<1x8x16x128xbf16>
    %34 = vector.shape_cast %33 : vector<1x8x16x128xbf16> to vector<8x16x128xbf16>
    %35 = vector.shape_cast %34 : vector<8x16x128xbf16> to vector<128x128xbf16>
    %36 = arith.extf %35 : vector<128x128xbf16> to vector<128x128xf32>
    %37 = arith.addf %31, %36 : vector<128x128xf32>
    %cst_23 = arith.constant 0.000000e+00 : f32
    %38 = vector.broadcast %cst_23 : f32 to vector<128x128xf32>
    %39 = arith.maximumf %37, %38 : vector<128x128xf32>
    %40 = vector.shape_cast %39 : vector<128x128xf32> to vector<8x16x128xf32>
    %41 = arith.truncf %40 : vector<8x16x128xf32> to vector<8x16x128xbf16>
    %c0_24 = arith.constant 0 : index
    %c0_25 = arith.constant 0 : index
    %c0_26 = arith.constant 0 : index
    %c0_27 = arith.constant 0 : index
    %42 = vector.load %arg6[%c0_24, %c0_25, %c0_26, %c0_27] : memref<1x8x16x128xbf16, #tpu.memory_space<vmem>>, vector<1x8x16x128xbf16>
    %43 = vector.shape_cast %42 : vector<1x8x16x128xbf16> to vector<8x16x128xbf16>
    %44 = vector.shape_cast %41 : vector<8x16x128xbf16> to vector<1x8x16x128xbf16>
    tpu.vector_store %arg6[%c0_24, %c0_25, %c0_26, %c0_27], %44 {strides = array<i32>} : memref<1x8x16x128xbf16, #tpu.memory_space<vmem>>, vector<1x8x16x128xbf16>,
    return
  }
  func.func @transform_0(%arg0: i32, %arg1: i32) -> (i32, i32, i32, i32) {
    %c0_i32 = arith.constant 0 : i32
    %c0_i32_0 = arith.constant 0 : i32
    %c0_i32_1 = arith.constant 0 : i32
    %c0_i32_2 = arith.constant 0 : i32
    return %arg0, %c0_i32, %c0_i32_0, %c0_i32_1 : i32, i32, i32, i32
  }
  func.func @transform_1(%arg0: i32, %arg1: i32) -> (i32, i32) {
    %c0_i32 = arith.constant 0 : i32
    %c0_i32_0 = arith.constant 0 : i32
    %c0_i32_1 = arith.constant 0 : i32
    return %c0_i32, %c0_i32_0 : i32, i32
  }
  func.func @transform_2(%arg0: i32, %arg1: i32) -> (i32, i32, i32) {
    %c0_i32 = arith.constant 0 : i32
    %c0_i32_0 = arith.constant 0 : i32
    %c0_i32_1 = arith.constant 0 : i32
    %c0_i32_2 = arith.constant 0 : i32
    return %c0_i32, %c0_i32_0, %c0_i32_1 : i32, i32, i32
  }
  func.func @transform_3(%arg0: i32, %arg1: i32) -> (i32, i32) {
    %c0_i32 = arith.constant 0 : i32
    %c0_i32_0 = arith.constant 0 : i32
    %c0_i32_1 = arith.constant 0 : i32
    return %c0_i32, %c0_i32_0 : i32, i32
  }
  func.func @transform_4(%arg0: i32, %arg1: i32) -> (i32, i32, i32, i32) {
    %c0_i32 = arith.constant 0 : i32
    %c0_i32_0 = arith.constant 0 : i32
    %c0_i32_1 = arith.constant 0 : i32
    return %arg0, %arg1, %c0_i32, %c0_i32_0 : i32, i32, i32, i32
  }
}

</mosaic_0001>

<llo_original>
// kernel: tpu_custom_call.1
$region0: #{tpu_custom_call.1}
  #allocation0 [shape = 'u32[]', space=smem, size = 0x4, offset = 0x4, fixed_abs, tag = 'smem constant byte address 0x4 - core index']
  #allocation1 [shape = 'u32[144,128]{1,0:T(1,128)}', space=vmem, size = 0x12000, scoped, tag = 'internal scratch']
  #allocation2 [shape = 'bf16[18,16,384]{2,1,0:T(16,128)(2,1)}', space=vmem, size = 0x36000, scoped, tag = 'scratch operand']
  %s0 = inlined_call_operand.hbm [shape: bf16[2,16,16,128], index: 0, kind: input, shape index: {}]
  %s1 = inlined_call_operand.hbm [shape: bf16[128,128], index: 1, kind: input, shape index: {}]
  %s2 = inlined_call_operand.hbm [shape: bf16[3,384,128], index: 2, kind: input, shape index: {}]
  %s3 = inlined_call_operand.hbm [shape: bf16[128,128], index: 3, kind: input, shape index: {}]
  %s4 = inlined_call_operand.hbm [shape: bf16[2,16,16,128], index: 4, kind: output, shape index: {}]
  %s5 = sld [smem:[#allocation0]]
  $region69: #{tpu_custom_call.1} parent=0
    _
  %s7 = ssub.s32 1, %s5
  %s8 = scalar_select 0, %s7, %s5
  $region1: #{tpu_custom_call.1} parent=0
    #allocation3 [shape = 'u8[131072]{0}', space=vmem, size = 0x20000, scoped, tag = 'input window, operand 0']
    #allocation4 [shape = 's32[2]{0}', space=sflag, size = 0x8, scoped, tag = 'scoped memory for tpu_custom_call.1']
    #allocation5 [shape = 's32[2]{0}', space=sflag, size = 0x8, scoped, tag = 'scoped memory for tpu_custom_call.1']
    #allocation6 [shape = 'u8[32768]{0}', space=vmem, size = 0x8000, scoped, tag = 'input window, operand 1, single buffered']
    #allocation7 [shape = 's32[1]{0}', space=sflag, size = 0x4, scoped, tag = 'scoped memory for tpu_custom_call.1']
    #allocation8 [shape = 'u8[294912]{0}', space=vmem, size = 0x48000, scoped, tag = 'input window, operand 2, single buffered']
    #allocation9 [shape = 'u8[32768]{0}', space=vmem, size = 0x8000, scoped, tag = 'input window, operand 3, single buffered']
    #allocation10 [shape = 's32[1]{0}', space=sflag, size = 0x4, scoped, tag = 'scoped memory for tpu_custom_call.1']
    #allocation11 [shape = 'u8[65536]{0}', space=vmem, size = 0x10000, scoped, tag = 'output window, operand 0']
    %9 = vsyncpa [#allocation4], 0
    %s10 = scalar_lea.sflag [#allocation4], 1
    %11 = vsyncpa %s10, 0
    %12 = vsyncpa [#allocation7], 0
    %13 = vsyncpa [#allocation10], 0
    %14 = vsyncpa [#allocation5], 0
    %s15 = scalar_lea.sflag [#allocation5], 1
    %16 = vsyncpa %s15, 0
    loop: start=0, step=1, limit=6
    $region2: #{tpu_custom_call.1} parent=1 // loop_pre_header
      _
    $region3: #{tpu_custom_call.1} parent=1 // loop_header
      %s18 = sphi 0, %s22
      %p19 = scmp.ge.s32.totalorder %s18, 6
      %s25 = sphi 0, %s37
      %s26 = sphi 0, %s33
      %s27 = sphi 0, %s25
      %s28 = sphi 0, %s26
      %s29 = sphi 0, %s27
      %s30 = sphi 0, %s28
      %s40 = sphi 0, %s42
      %s43 = sphi 0, %s40
      %s44 = sphi 0, %s43
      %s60 = sphi 0, %s44
      %s64 = sphi 0, %s64
      %s66 = sphi 0, %s64
      %s67 = sphi 0, %s66
      %s81 = sphi 0, %s67
      %s85 = sphi 0, %s85
      %s87 = sphi 0, %s85
      %s88 = sphi 0, %s87
      %s102 = sphi 0, %s88
      %s106 = sphi 0, %s106
      %s108 = sphi 0, %s106
      %s109 = sphi 0, %s108
      %s123 = sphi 0, %s109
      %s131 = sphi 0, %s133
      %s134 = sphi 0, %s131
      %s135 = sphi 0, %s134
      %s151 = sphi 0, %s135
    $region4: #{tpu_custom_call.1} parent=1 // loop_header_branch
      %21 = sbr.rel (%p19) target = $region8
    $region5: #{tpu_custom_call.1} parent=1 // loop_body
      %s23 = ssub.s32 %s18, 1
      %s24 = ssub.s32 %s18, 2
      %s31 = sadd.s32 1, %s26
      %p32 = scmp.ge.s32.totalorder %s31, 2
      %s33 = scalar_select %p32, 0, %s31
      %s34 = sadd.s32 1, %s25
      %s35 = scalar_select %p32, %s34, %s25
      %p36 = scmp.ge.s32.totalorder %s35, 2
      %s37 = scalar_select %p36, 0, %s35
      %s38 = ssub.s32 %s25, %s37
      %p39 = scmp.eq.s32.totalorder %s38, 0
      %s41 = sadd.s32 %s40, 1
      %s42 = scalar_select %p39, %s40, %s41
      %p45 = pneg %p39
      %p46 = scmp.eq.s32.totalorder %s18, 3
      %p47 = por %p45, %p46
      %p48 = scmp.ne.s32.totalorder %s40, %s43
      %p49 = scmp.eq.s32.totalorder %s18, 0
      %p50 = por %p48, %p49
      %p51 = scmp.ne.s32.totalorder %s40, %s43
      %p52 = scmp.eq.s32.totalorder %s23, 3
      %p53 = por %p51, %p52
      %p54 = scmp.ne.s32.totalorder %s43, %s44
      %p55 = scmp.eq.s32.totalorder %s23, 0
      %p56 = por %p54, %p55
      %p57 = scmp.ne.s32.totalorder %s43, %s44
      %p58 = scmp.eq.s32.totalorder %s24, 3
      %p59 = por %p57, %p58
      %p61 = scmp.ne.s32.totalorder %s44, %s60
      %p62 = scmp.eq.s32.totalorder %s24, 0
      %p63 = por %p61, %p62
      %s65 = sadd.s32 %s64, 1
      %p68 = scmp.eq.s32.totalorder %s18, 3
      %p69 = scmp.ne.s32.totalorder %s64, %s66
      %p70 = scmp.eq.s32.totalorder %s18, 0
      %p71 = por %p69, %p70
      %p72 = scmp.ne.s32.totalorder %s64, %s66
      %p73 = scmp.eq.s32.totalorder %s23, 3
      %p74 = por %p72, %p73
      %p75 = scmp.ne.s32.totalorder %s66, %s67
      %p76 = scmp.eq.s32.totalorder %s23, 0
      %p77 = por %p75, %p76
      %p78 = scmp.ne.s32.totalorder %s66, %s67
      %p79 = scmp.eq.s32.totalorder %s24, 3
      %p80 = por %p78, %p79
      %p82 = scmp.ne.s32.totalorder %s67, %s81
      %p83 = scmp.eq.s32.totalorder %s24, 0
      %p84 = por %p82, %p83
      %s86 = sadd.s32 %s85, 1
      %p89 = scmp.eq.s32.totalorder %s18, 3
      %p90 = scmp.ne.s32.totalorder %s85, %s87
      %p91 = scmp.eq.s32.totalorder %s18, 0
      %p92 = por %p90, %p91
      %p93 = scmp.ne.s32.totalorder %s85, %s87
      %p94 = scmp.eq.s32.totalorder %s23, 3
      %p95 = por %p93, %p94
      %p96 = scmp.ne.s32.totalorder %s87, %s88
      %p97 = scmp.eq.s32.totalorder %s23, 0
      %p98 = por %p96, %p97
      %p99 = scmp.ne.s32.totalorder %s87, %s88
      %p100 = scmp.eq.s32.totalorder %s24, 3
      %p101 = por %p99, %p100
      %p103 = scmp.ne.s32.totalorder %s88, %s102
      %p104 = scmp.eq.s32.totalorder %s24, 0
      %p105 = por %p103, %p104
      %s107 = sadd.s32 %s106, 1
      %p110 = scmp.eq.s32.totalorder %s18, 3
      %p111 = scmp.ne.s32.totalorder %s106, %s108
      %p112 = scmp.eq.s32.totalorder %s18, 0
      %p113 = por %p111, %p112
      %p114 = scmp.ne.s32.totalorder %s106, %s108
      %p115 = scmp.eq.s32.totalorder %s23, 3
      %p116 = por %p114, %p115
      %p117 = scmp.ne.s32.totalorder %s108, %s109
      %p118 = scmp.eq.s32.totalorder %s23, 0
      %p119 = por %p117, %p118
      %p120 = scmp.ne.s32.totalorder %s108, %s109
      %p121 = scmp.eq.s32.totalorder %s24, 3
      %p122 = por %p120, %p121
      %p124 = scmp.ne.s32.totalorder %s109, %s123
      %p125 = scmp.eq.s32.totalorder %s24, 0
      %p126 = por %p124, %p125
      %s127 = ssub.s32 %s25, %s37
      %s128 = ssub.s32 %s26, %s33
      %s129 = sor.u32 %s127, %s128
      %p130 = scmp.eq.s32.totalorder %s129, 0
      %s132 = sadd.s32 %s131, 1
      %s133 = scalar_select %p130, %s131, %s132
      %p136 = pneg %p130
      %p137 = scmp.eq.s32.totalorder %s18, 3
      %p138 = por %p136, %p137
      %p139 = scmp.ne.s32.totalorder %s131, %s134
      %p140 = scmp.eq.s32.totalorder %s18, 0
      %p141 = por %p139, %p140
      %p142 = scmp.ne.s32.totalorder %s131, %s134
      %p143 = scmp.eq.s32.totalorder %s23, 3
      %p144 = por %p142, %p143
      %p145 = scmp.ne.s32.totalorder %s134, %s135
      %p146 = scmp.eq.s32.totalorder %s23, 0
      %p147 = por %p145, %p146
      %p148 = scmp.ne.s32.totalorder %s134, %s135
      %p149 = scmp.eq.s32.totalorder %s24, 3
      %p150 = por %p148, %p149
      %p152 = scmp.ne.s32.totalorder %s135, %s151
      %p153 = scmp.eq.s32.totalorder %s24, 0
      %p154 = por %p152, %p153
      %p155 = scmp.le.s32.totalorder 1, %s18
      %p156 = scmp.lt.s32.totalorder %s18, 5
      %p157 = pnand %p155, %p156
      %p158 = pneg %p157
      // Predicated region
      $region9: #{tpu_custom_call.1} parent=5 // pred_check
        _
      $region10: #{tpu_custom_call.1} parent=5 // pred_check_branch
        %160 = sbr.rel (%p157) target = $region12
      $region11: #{tpu_custom_call.1} parent=5 // pred_region
        %s161 = ssub.s32 %s18, 1
        // Predicated region
        $region13: #{tpu_custom_call.1} parent=11 // pred_check
          %p162 = pneg %p77
        $region14: #{tpu_custom_call.1} parent=11 // pred_check_branch
          %164 = sbr.rel (%p162) target = $region16
        $region15: #{tpu_custom_call.1} parent=11 // pred_region
          %s166 = ssub.s32 1024, 1024
          %167 = vsyncadd [#allocation7], %s166
          %s168 = sshll.u32 [#allocation6], 4
          %s169 = int_to_ptr.vmem [resolvable:$true] %s168
          %174 = dma.hbm_to_vmem [thread:$0]  %s1, 1024, %s169, [#allocation7], 64, 64, 4
        $region16: #{tpu_custom_call.1} parent=11 // pred_fallthru
          _
        // Predicated region
        $region17: #{tpu_custom_call.1} parent=11 // pred_check
          %p175 = pneg %p98
        $region18: #{tpu_custom_call.1} parent=11 // pred_check_branch
          %177 = sbr.rel (%p175) target = $region20
        $region19: #{tpu_custom_call.1} parent=11 // pred_region
          %s179 = ssub.s32 9216, 9216
          %180 = vsyncadd [#allocation7], %s179
          %s181 = sshll.u32 [#allocation8], 4
          %s182 = int_to_ptr.vmem [resolvable:$true] %s181
          %187 = dma.hbm_to_vmem [thread:$0]  %s2, 9216, %s182, [#allocation7], 64, 64, 4
        $region20: #{tpu_custom_call.1} parent=11 // pred_fallthru
          _
        // Predicated region
        $region21: #{tpu_custom_call.1} parent=11 // pred_check
          %p188 = pneg %p119
        $region22: #{tpu_custom_call.1} parent=11 // pred_check_branch
          %190 = sbr.rel (%p188) target = $region24
        $region23: #{tpu_custom_call.1} parent=11 // pred_region
          %s192 = ssub.s32 1024, 1024
          %193 = vsyncadd [#allocation10], %s192
          %s194 = sshll.u32 [#allocation9], 4
          %s195 = int_to_ptr.vmem [resolvable:$true] %s194
          %200 = dma.hbm_to_vmem [thread:$0]  %s3, 1024, %s195, [#allocation10], 64, 64, 4
        $region24: #{tpu_custom_call.1} parent=11 // pred_fallthru
          _
      $region12: #{tpu_custom_call.1} parent=5 // pred_fallthru
        _
      %p201 = scmp.lt.s32.totalorder %s18, 4
      // Predicated region
      $region25: #{tpu_custom_call.1} parent=5 // pred_check
        %p202 = pneg %p201
      $region26: #{tpu_custom_call.1} parent=5 // pred_check_branch
        %204 = sbr.rel (%p202) target = $region28
      $region27: #{tpu_custom_call.1} parent=5 // pred_region
        // Predicated region
        $region29: #{tpu_custom_call.1} parent=27 // pred_check
          %p205 = pneg %p50
        $region30: #{tpu_custom_call.1} parent=27 // pred_check_branch
          %207 = sbr.rel (%p205) target = $region32
        $region31: #{tpu_custom_call.1} parent=27 // pred_region
          %s208 = sand.u32 %s40, 1
          %s209 = scalar_lea.sflag [#allocation4], %s208
          %s210 = sand.u32 %s40, 1
          %s211 = smul.addr %s210, 128
          %s212 = scalar_lea.vmem [#allocation3], %s211
          %s214 = ssub.s32 2048, 2048
          %215 = vsyncadd %s209, %s214
          %s216 = smul.addr %s25, 32
          %s217 = smul.addr %s216, 64
          %s218 = scalar_lea.hbm %s0, %s217
          %s219 = sshll.u32 %s212, 4
          %s220 = int_to_ptr.vmem [resolvable:$true] %s219
          %225 = dma.hbm_to_vmem [thread:$0]  %s218, 2048, %s220, %s209, 64, 64, 4
        $region32: #{tpu_custom_call.1} parent=27 // pred_fallthru
          _
      $region28: #{tpu_custom_call.1} parent=5 // pred_fallthru
        _
      %p226 = scmp.le.s32.totalorder 1, %s18
      %p227 = scmp.lt.s32.totalorder %s18, 5
      %p228 = pnand %p226, %p227
      %p229 = pneg %p228
      // Predicated region
      $region33: #{tpu_custom_call.1} parent=5 // pred_check
        _
      $region34: #{tpu_custom_call.1} parent=5 // pred_check_branch
        %231 = sbr.rel (%p228) target = $region36
      $region35: #{tpu_custom_call.1} parent=5 // pred_region
        %s232 = ssub.s32 %s18, 1
        %s233 = sand.u32 %s43, 1
        %s234 = scalar_lea.sflag [#allocation4], %s233
        %s235 = sand.u32 %s43, 1
        %s236 = smul.addr %s235, 128
        %s237 = scalar_lea.vmem [#allocation3], %s236
        // Predicated region
        $region37: #{tpu_custom_call.1} parent=35 // pred_check
          %p238 = pneg %p56
        $region38: #{tpu_custom_call.1} parent=35 // pred_check_branch
          %240 = sbr.rel (%p238) target = $region40
        $region39: #{tpu_custom_call.1} parent=35 // pred_region
          %241 = dma.done %s234, 2048
        $region40: #{tpu_custom_call.1} parent=35 // pred_fallthru
          _
        // Predicated region
        $region41: #{tpu_custom_call.1} parent=35 // pred_check
          %p242 = pneg %p77
        $region42: #{tpu_custom_call.1} parent=35 // pred_check_branch
          %244 = sbr.rel (%p242) target = $region44
        $region43: #{tpu_custom_call.1} parent=35 // pred_region
          %245 = dma.done [#allocation7], 1024
        $region44: #{tpu_custom_call.1} parent=35 // pred_fallthru
          _
        // Predicated region
        $region45: #{tpu_custom_call.1} parent=35 // pred_check
          %p246 = pneg %p98
        $region46: #{tpu_custom_call.1} parent=35 // pred_check_branch
          %248 = sbr.rel (%p246) target = $region48
        $region47: #{tpu_custom_call.1} parent=35 // pred_region
          %249 = dma.done [#allocation7], 9216
        $region48: #{tpu_custom_call.1} parent=35 // pred_fallthru
          _
        // Predicated region
        $region49: #{tpu_custom_call.1} parent=35 // pred_check
          %p250 = pneg %p119
        $region50: #{tpu_custom_call.1} parent=35 // pred_check_branch
          %252 = sbr.rel (%p250) target = $region52
        $region51: #{tpu_custom_call.1} parent=35 // pred_region
          %253 = dma.done [#allocation10], 1024
        $region52: #{tpu_custom_call.1} parent=35 // pred_fallthru
          _
        %s254 = sand.u32 %s43, 1
        %s255 = scalar_lea.sflag [#allocation4], %s254
        %s256 = sand.u32 %s43, 1
        %s257 = smul.addr %s256, 128
        %s258 = scalar_lea.vmem [#allocation3], %s257
        %p259 = pneg %p56
        %p260 = pneg %p53
        %p261 = pneg %p77
        %p262 = pneg %p74
        %p263 = pneg %p98
        %p264 = pneg %p95
        %p265 = pneg %p119
        %p266 = pneg %p116
        %p267 = pneg %p147
        %p268 = pneg %p144
        %s269 = sand.u32 %s134, 1
        %s270 = scalar_lea.sflag [#allocation5], %s269
        %s271 = sand.u32 %s134, 1
        %s272 = smul.addr %s271, 64
        %s273 = scalar_lea.vmem [#allocation11], %s272
        %s274 = smul.u32 8, %s28
        %s276 = smul.u32 %s28, 8
        %p277 = scmp.eq.s32.totalorder %s28, 0
        // Predicated region
        $region53: #{tpu_custom_call.1} parent=35 // pred_check
          %p278 = pneg %p277
        $region54: #{tpu_custom_call.1} parent=35 // pred_check_branch
          %280 = sbr.rel (%p278) target = $region56
        $region55: #{tpu_custom_call.1} parent=35 // pred_region
          %v281 = vld [vmem:[%s237] sm:$0xf]
          %v282 = vld [vmem:[%s237 + $0x4] sm:$0xf]
          %v283 = vld [vmem:[%s237 + $0x8] sm:$0xf]
          %v284 = vld [vmem:[%s237 + $0xc] sm:$0xf]
          %v285 = vld [vmem:[%s237 + $0x10] sm:$0xf]
          %v286 = vld [vmem:[%s237 + $0x14] sm:$0xf]
          %v287 = vld [vmem:[%s237 + $0x18] sm:$0xf]
          %v288 = vld [vmem:[%s237 + $0x1c] sm:$0xf]
          %v289 = vld [vmem:[%s237 + $0x20] sm:$0xf]
          %v290 = vld [vmem:[%s237 + $0x24] sm:$0xf]
          %v291 = vld [vmem:[%s237 + $0x28] sm:$0xf]
          %v292 = vld [vmem:[%s237 + $0x2c] sm:$0xf]
          %v293 = vld [vmem:[%s237 + $0x30] sm:$0xf]
          %v294 = vld [vmem:[%s237 + $0x34] sm:$0xf]
          %v295 = vld [vmem:[%s237 + $0x38] sm:$0xf]
          %v296 = vld [vmem:[%s237 + $0x3c] sm:$0xf]
          %v297 = vld [vmem:[%s237 + $0x40] sm:$0xf]
          %v298 = vld [vmem:[%s237 + $0x44] sm:$0xf]
          %v299 = vld [vmem:[%s237 + $0x48] sm:$0xf]
          %v300 = vld [vmem:[%s237 + $0x4c] sm:$0xf]
          %v301 = vld [vmem:[%s237 + $0x50] sm:$0xf]
          %v302 = vld [vmem:[%s237 + $0x54] sm:$0xf]
          %v303 = vld [vmem:[%s237 + $0x58] sm:$0xf]
          %v304 = vld [vmem:[%s237 + $0x5c] sm:$0xf]
          %v305 = vld [vmem:[%s237 + $0x60] sm:$0xf]
          %v306 = vld [vmem:[%s237 + $0x64] sm:$0xf]
          %v307 = vld [vmem:[%s237 + $0x68] sm:$0xf]
          %v308 = vld [vmem:[%s237 + $0x6c] sm:$0xf]
          %v309 = vld [vmem:[%s237 + $0x70] sm:$0xf]
          %v310 = vld [vmem:[%s237 + $0x74] sm:$0xf]
          %v311 = vld [vmem:[%s237 + $0x78] sm:$0xf]
          %v312 = vld [vmem:[%s237 + $0x7c] sm:$0xf]
          %v313 = vld [vmem:[#allocation6] sm:$0xf]
          %v314 = vld [vmem:[#allocation6 + $0x4] sm:$0xf]
          %v315 = vld [vmem:[#allocation6 + $0x8] sm:$0xf]
          %v316 = vld [vmem:[#allocation6 + $0xc] sm:$0xf]
          %v317 = vld [vmem:[#allocation6 + $0x10] sm:$0xf]
          %v318 = vld [vmem:[#allocation6 + $0x14] sm:$0xf]
          %v319 = vld [vmem:[#allocation6 + $0x18] sm:$0xf]
          %v320 = vld [vmem:[#allocation6 + $0x1c] sm:$0xf]
          %v321 = vld [vmem:[#allocation6 + $0x20] sm:$0xf]
          %v322 = vld [vmem:[#allocation6 + $0x24] sm:$0xf]
          %v323 = vld [vmem:[#allocation6 + $0x28] sm:$0xf]
          %v324 = vld [vmem:[#allocation6 + $0x2c] sm:$0xf]
          %v325 = vld [vmem:[#allocation6 + $0x30] sm:$0xf]
          %v326 = vld [vmem:[#allocation6 + $0x34] sm:$0xf]
          %v327 = vld [vmem:[#allocation6 + $0x38] sm:$0xf]
          %v328 = vld [vmem:[#allocation6 + $0x3c] sm:$0xf]
          %v361 = vunpack.c.l.b16 %v281
          %v362 = vunpack.c.l.b16 %v282
          %v363 = vunpack.c.l.b16 %v283
          %v364 = vunpack.c.l.b16 %v284
          %v365 = vunpack.c.l.b16 %v285
          %v366 = vunpack.c.l.b16 %v286
          %v367 = vunpack.c.l.b16 %v287
          %v368 = vunpack.c.l.b16 %v288
          %v369 = vunpack.c.l.b16 %v289
          %v370 = vunpack.c.l.b16 %v290
          %v371 = vunpack.c.l.b16 %v291
          %v372 = vunpack.c.l.b16 %v292
          %v373 = vunpack.c.l.b16 %v293
          %v374 = vunpack.c.l.b16 %v294
          %v375 = vunpack.c.l.b16 %v295
          %v376 = vunpack.c.l.b16 %v296
          %v377 = vunpack.c.l.b16 %v297
          %v378 = vunpack.c.l.b16 %v298
          %v379 = vunpack.c.l.b16 %v299
          %v380 = vunpack.c.l.b16 %v300
          %v381 = vunpack.c.l.b16 %v301
          %v382 = vunpack.c.l.b16 %v302
          %v383 = vunpack.c.l.b16 %v303
          %v384 = vunpack.c.l.b16 %v304
          %v385 = vunpack.c.l.b16 %v305
          %v386 = vunpack.c.l.b16 %v306
          %v387 = vunpack.c.l.b16 %v307
          %v388 = vunpack.c.l.b16 %v308
          %v389 = vunpack.c.l.b16 %v309
          %v390 = vunpack.c.l.b16 %v310
          %v391 = vunpack.c.l.b16 %v311
          %v392 = vunpack.c.l.b16 %v312
          %v393 = vpack.c.b16 %v362, %v361
          %v394 = vpack.c.b16 %v364, %v363
          %v395 = vpack.c.b16 %v366, %v365
          %v396 = vpack.c.b16 %v368, %v367
          %v397 = vpack.c.b16 %v370, %v369
          %v398 = vpack.c.b16 %v372, %v371
          %v399 = vpack.c.b16 %v374, %v373
          %v400 = vpack.c.b16 %v376, %v375
          %v401 = vpack.c.b16 %v378, %v377
          %v402 = vpack.c.b16 %v380, %v379
          %v403 = vpack.c.b16 %v382, %v381
          %v404 = vpack.c.b16 %v384, %v383
          %v405 = vpack.c.b16 %v386, %v385
          %v406 = vpack.c.b16 %v388, %v387
          %v407 = vpack.c.b16 %v390, %v389
          %v408 = vpack.c.b16 %v392, %v391
          %v441 = vunpack.c.l.b16 %v313
          %v442 = vunpack.c.l.b16 %v314
          %v443 = vunpack.c.l.b16 %v315
          %v444 = vunpack.c.l.b16 %v316
          %v445 = vunpack.c.l.b16 %v317
          %v446 = vunpack.c.l.b16 %v318
          %v447 = vunpack.c.l.b16 %v319
          %v448 = vunpack.c.l.b16 %v320
          %v449 = vunpack.c.l.b16 %v321
          %v450 = vunpack.c.l.b16 %v322
          %v451 = vunpack.c.l.b16 %v323
          %v452 = vunpack.c.l.b16 %v324
          %v453 = vunpack.c.l.b16 %v325
          %v454 = vunpack.c.l.b16 %v326
          %v455 = vunpack.c.l.b16 %v327
          %v456 = vunpack.c.l.b16 %v328
          %v457 = vpack.c.b16 %v442, %v441
          %v458 = vpack.c.b16 %v444, %v443
          %v459 = vpack.c.b16 %v446, %v445
          %v460 = vpack.c.b16 %v448, %v447
          %v461 = vpack.c.b16 %v450, %v449
          %v462 = vpack.c.b16 %v452, %v451
          %v463 = vpack.c.b16 %v454, %v453
          %v464 = vpack.c.b16 %v456, %v455
          %473 = vmatprep.subr.bf16.mxu0 0
          %474 = vmatpush1.bf16.msra.mxu0 %v457
          %475 = vmatprep.subr.bf16.mxu0 0
          %476 = vmatpush1.bf16.msra.mxu0 %v458
          %477 = vmatprep.subr.bf16.mxu0 0
          %478 = vmatpush1.bf16.msra.mxu0 %v459
          %479 = vmatprep.subr.bf16.mxu0 0
          %480 = vmatpush1.bf16.msra.mxu0 %v460
          %481 = vmatprep.subr.bf16.mxu0 0
          %482 = vmatpush1.bf16.msra.mxu0 %v461
          %483 = vmatprep.subr.bf16.mxu0 0
          %484 = vmatpush1.bf16.msra.mxu0 %v462
          %485 = vmatprep.subr.bf16.mxu0 0
          %486 = vmatpush1.bf16.msra.mxu0 %v463
          %487 = vmatprep.subr.bf16.mxu0 0
          %488 = vmatpush1.bf16.msra.mxu0 %v464
          %489 = vmatprep.subr.bf16.mxu0 0
          %490 = vmatpush1.bf16.msra.mxu0 0
          %491 = vmatprep.subr.bf16.mxu0 0
          %492 = vmatpush1.bf16.msra.mxu0 0
          %493 = vmatprep.subr.bf16.mxu0 0
          %494 = vmatpush1.bf16.msra.mxu0 0
          %495 = vmatprep.subr.bf16.mxu0 0
          %496 = vmatpush1.bf16.msra.mxu0 0
          %497 = vmatprep.subr.bf16.mxu0 0
          %498 = vmatpush1.bf16.msra.mxu0 0
          %499 = vmatprep.subr.bf16.mxu0 0
          %500 = vmatpush1.bf16.msra.mxu0 0
          %501 = vmatprep.subr.bf16.mxu0 0
          %502 = vmatpush1.bf16.msra.mxu0 0
          %503 = vmatprep.subr.bf16.mxu0 0
          %504 = vmatpush1.bf16.msra.mxu0 0
          %505 = vmatprep.mubr.bf16.mxu0 0
          %506 = vmatmul.mubr.bf16.gmra.mrb[0].mxu0 %v393
          %v507 = vpop.f32.mrb[0].mxu0
          %v508 = vadd.f32 0.0, %v507
          %v509 = vpop.f32.mrb[0].mxu0
          %v510 = vpop.f32.mrb[0].mxu0
          %v511 = vadd.f32 0.0, %v510
          %v512 = vpop.f32.mrb[0].mxu0
          %513 = vmatprep.mubr.bf16.mxu0 0
          %514 = vmatmul.mubr.bf16.gmra.mrb[0].mxu0 %v394
          %v515 = vpop.f32.mrb[0].mxu0
          %v516 = vadd.f32 0.0, %v515
          %v517 = vpop.f32.mrb[0].mxu0
          %v518 = vpop.f32.mrb[0].mxu0
          %v519 = vadd.f32 0.0, %v518
          %v520 = vpop.f32.mrb[0].mxu0
          %521 = vmatprep.mubr.bf16.mxu0 0
          %522 = vmatmul.mubr.bf16.gmra.mrb[0].mxu0 %v395
          %v523 = vpop.f32.mrb[0].mxu0
          %v524 = vadd.f32 0.0, %v523
          %v525 = vpop.f32.mrb[0].mxu0
          %v526 = vpop.f32.mrb[0].mxu0
          %v527 = vadd.f32 0.0, %v526
          %v528 = vpop.f32.mrb[0].mxu0
          %529 = vmatprep.mubr.bf16.mxu0 0
          %530 = vmatmul.mubr.bf16.gmra.mrb[0].mxu0 %v396
          %v531 = vpop.f32.mrb[0].mxu0
          %v532 = vadd.f32 0.0, %v531
          %v533 = vpop.f32.mrb[0].mxu0
          %v534 = vpop.f32.mrb[0].mxu0
          %v535 = vadd.f32 0.0, %v534
          %v536 = vpop.f32.mrb[0].mxu0
          %537 = vmatprep.mubr.bf16.mxu0 0
          %538 = vmatmul.mubr.bf16.gmra.mrb[0].mxu0 %v397
          %v539 = vpop.f32.mrb[0].mxu0
          %v540 = vadd.f32 0.0, %v539
          %v541 = vpop.f32.mrb[0].mxu0
          %v542 = vpop.f32.mrb[0].mxu0
          %v543 = vadd.f32 0.0, %v542
          %v544 = vpop.f32.mrb[0].mxu0
          %545 = vmatprep.mubr.bf16.mxu0 0
          %546 = vmatmul.mubr.bf16.gmra.mrb[0].mxu0 %v398
          %v547 = vpop.f32.mrb[0].mxu0
          %v548 = vadd.f32 0.0, %v547
          %v549 = vpop.f32.mrb[0].mxu0
          %v550 = vpop.f32.mrb[0].mxu0
          %v551 = vadd.f32 0.0, %v550
          %v552 = vpop.f32.mrb[0].mxu0
          %553 = vmatprep.mubr.bf16.mxu0 0
          %554 = vmatmul.mubr.bf16.gmra.mrb[0].mxu0 %v399
          %v555 = vpop.f32.mrb[0].mxu0
          %v556 = vadd.f32 0.0, %v555
          %v557 = vpop.f32.mrb[0].mxu0
          %v558 = vpop.f32.mrb[0].mxu0
          %v559 = vadd.f32 0.0, %v558
          %v560 = vpop.f32.mrb[0].mxu0
          %561 = vmatprep.mubr.bf16.mxu0 0
          %562 = vmatmul.mubr.bf16.gmra.mrb[0].mxu0 %v400
          %v563 = vpop.f32.mrb[0].mxu0
          %v564 = vadd.f32 0.0, %v563
          %v565 = vpop.f32.mrb[0].mxu0
          %v566 = vpop.f32.mrb[0].mxu0
          %v567 = vadd.f32 0.0, %v566
          %v568 = vpop.f32.mrb[0].mxu0
          %569 = vmatprep.mubr.bf16.mxu0 0
          %570 = vmatmul.mubr.bf16.gmra.mrb[0].mxu0 %v401
          %v571 = vpop.f32.mrb[0].mxu0
          %v572 = vadd.f32 0.0, %v571
          %v573 = vpop.f32.mrb[0].mxu0
          %v574 = vpop.f32.mrb[0].mxu0
          %v575 = vadd.f32 0.0, %v574
          %v576 = vpop.f32.mrb[0].mxu0
          %577 = vmatprep.mubr.bf16.mxu0 0
          %578 = vmatmul.mubr.bf16.gmra.mrb[0].mxu0 %v402
          %v579 = vpop.f32.mrb[0].mxu0
          %v580 = vadd.f32 0.0, %v579
          %v581 = vpop.f32.mrb[0].mxu0
          %v582 = vpop.f32.mrb[0].mxu0
          %v583 = vadd.f32 0.0, %v582
          %v584 = vpop.f32.mrb[0].mxu0
          %585 = vmatprep.mubr.bf16.mxu0 0
          %586 = vmatmul.mubr.bf16.gmra.mrb[0].mxu0 %v403
          %v587 = vpop.f32.mrb[0].mxu0
          %v588 = vadd.f32 0.0, %v587
          %v589 = vpop.f32.mrb[0].mxu0
          %v590 = vpop.f32.mrb[0].mxu0
          %v591 = vadd.f32 0.0, %v590
          %v592 = vpop.f32.mrb[0].mxu0
          %593 = vmatprep.mubr.bf16.mxu0 0
          %594 = vmatmul.mubr.bf16.gmra.mrb[0].mxu0 %v404
          %v595 = vpop.f32.mrb[0].mxu0
          %v596 = vadd.f32 0.0, %v595
          %v597 = vpop.f32.mrb[0].mxu0
          %v598 = vpop.f32.mrb[0].mxu0
          %v599 = vadd.f32 0.0, %v598
          %v600 = vpop.f32.mrb[0].mxu0
          %601 = vmatprep.mubr.bf16.mxu0 0
          %602 = vmatmul.mubr.bf16.gmra.mrb[0].mxu0 %v405
          %v603 = vpop.f32.mrb[0].mxu0
          %v604 = vadd.f32 0.0, %v603
          %v605 = vpop.f32.mrb[0].mxu0
          %v606 = vpop.f32.mrb[0].mxu0
          %v607 = vadd.f32 0.0, %v606
          %v608 = vpop.f32.mrb[0].mxu0
          %609 = vmatprep.mubr.bf16.mxu0 0
          %610 = vmatmul.mubr.bf16.gmra.mrb[0].mxu0 %v406
          %v611 = vpop.f32.mrb[0].mxu0
          %v612 = vadd.f32 0.0, %v611
          %v613 = vpop.f32.mrb[0].mxu0
          %v614 = vpop.f32.mrb[0].mxu0
          %v615 = vadd.f32 0.0, %v614
          %v616 = vpop.f32.mrb[0].mxu0
          %617 = vmatprep.mubr.bf16.mxu0 0
          %618 = vmatmul.mubr.bf16.gmra.mrb[0].mxu0 %v407
          %v619 = vpop.f32.mrb[0].mxu0
          %v620 = vadd.f32 0.0, %v619
          %v621 = vpop.f32.mrb[0].mxu0
          %v622 = vpop.f32.mrb[0].mxu0
          %v623 = vadd.f32 0.0, %v622
          %v624 = vpop.f32.mrb[0].mxu0
          %625 = vmatprep.mubr.bf16.mxu0 0
          %626 = vmatmul.mubr.bf16.gmra.mrb[0].mxu0 %v408
          %v627 = vpop.f32.mrb[0].mxu0
          %v628 = vadd.f32 0.0, %v627
          %v629 = vpop.f32.mrb[0].mxu0
          %v630 = vpop.f32.mrb[0].mxu0
          %v631 = vadd.f32 0.0, %v630
          %v632 = vpop.f32.mrb[0].mxu0
          %633 = vdwg.mxu0
          %v634 = vmax.f32 %v508, 0.0
          %v635 = vmax.f32 %v511, 0.0
          %v636 = vmax.f32 %v516, 0.0
          %v637 = vmax.f32 %v519, 0.0
          %v638 = vmax.f32 %v524, 0.0
          %v639 = vmax.f32 %v527, 0.0
          %v640 = vmax.f32 %v532, 0.0
          %v641 = vmax.f32 %v535, 0.0
          %v642 = vmax.f32 %v540, 0.0
          %v643 = vmax.f32 %v543, 0.0
          %v644 = vmax.f32 %v548, 0.0
          %v645 = vmax.f32 %v551, 0.0
          %v646 = vmax.f32 %v556, 0.0
          %v647 = vmax.f32 %v559, 0.0
          %v648 = vmax.f32 %v564, 0.0
          %v649 = vmax.f32 %v567, 0.0
          %v650 = vmax.f32 %v572, 0.0
          %v651 = vmax.f32 %v575, 0.0
          %v652 = vmax.f32 %v580, 0.0
          %v653 = vmax.f32 %v583, 0.0
          %v654 = vmax.f32 %v588, 0.0
          %v655 = vmax.f32 %v591, 0.0
          %v656 = vmax.f32 %v596, 0.0
          %v657 = vmax.f32 %v599, 0.0
          %v658 = vmax.f32 %v604, 0.0
          %v659 = vmax.f32 %v607, 0.0
          %v660 = vmax.f32 %v612, 0.0
          %v661 = vmax.f32 %v615, 0.0
          %v662 = vmax.f32 %v620, 0.0
          %v663 = vmax.f32 %v623, 0.0
          %v664 = vmax.f32 %v628, 0.0
          %v665 = vmax.f32 %v631, 0.0
          %v666 = vpack.c.bf16 %v635, %v634
          %v667 = vpack.c.bf16 %v637, %v636
          %v668 = vpack.c.bf16 %v639, %v638
          %v669 = vpack.c.bf16 %v641, %v640
          %v670 = vpack.c.bf16 %v643, %v642
          %v671 = vpack.c.bf16 %v645, %v644
          %v672 = vpack.c.bf16 %v647, %v646
          %v673 = vpack.c.bf16 %v649, %v648
          %v674 = vpack.c.bf16 %v651, %v650
          %v675 = vpack.c.bf16 %v653, %v652
          %v676 = vpack.c.bf16 %v655, %v654
          %v677 = vpack.c.bf16 %v657, %v656
          %v678 = vpack.c.bf16 %v659, %v658
          %v679 = vpack.c.bf16 %v661, %v660
          %v680 = vpack.c.bf16 %v663, %v662
          %v681 = vpack.c.bf16 %v665, %v664
          %v683 = vshrl.u32 %v666, 16
          %v685 = vrot.slane %v683, 7
          %v686 = vshll.u32 %v666, 16
          %v688 = vor.u32 %v685, %v686
          %v690 = vshrl.u32 %v667, 16
          %v692 = vrot.slane %v690, 7
          %v693 = vshll.u32 %v667, 16
          %v695 = vor.u32 %v692, %v693
          %v697 = vshrl.u32 %v668, 16
          %v699 = vrot.slane %v697, 7
          %v700 = vshll.u32 %v668, 16
          %v702 = vor.u32 %v699, %v700
          %v704 = vshrl.u32 %v669, 16
          %v706 = vrot.slane %v704, 7
          %v707 = vshll.u32 %v669, 16
          %v709 = vor.u32 %v706, %v707
          %v711 = vshrl.u32 %v670, 16
          %v713 = vrot.slane %v711, 7
          %v714 = vshll.u32 %v670, 16
          %v716 = vor.u32 %v713, %v714
          %v718 = vshrl.u32 %v671, 16
          %v720 = vrot.slane %v718, 7
          %v721 = vshll.u32 %v671, 16
          %v723 = vor.u32 %v720, %v721
          %v725 = vshrl.u32 %v672, 16
          %v727 = vrot.slane %v725, 7
          %v728 = vshll.u32 %v672, 16
          %v730 = vor.u32 %v727, %v728
          %v732 = vshrl.u32 %v673, 16
          %v734 = vrot.slane %v732, 7
          %v735 = vshll.u32 %v673, 16
          %v737 = vor.u32 %v734, %v735
          %v739 = vshrl.u32 %v674, 16
          %v741 = vrot.slane %v739, 7
          %v742 = vshll.u32 %v674, 16
          %v744 = vor.u32 %v741, %v742
          %v746 = vshrl.u32 %v675, 16
          %v748 = vrot.slane %v746, 7
          %v749 = vshll.u32 %v675, 16
          %v751 = vor.u32 %v748, %v749
          %v753 = vshrl.u32 %v676, 16
          %v755 = vrot.slane %v753, 7
          %v756 = vshll.u32 %v676, 16
          %v758 = vor.u32 %v755, %v756
          %v760 = vshrl.u32 %v677, 16
          %v762 = vrot.slane %v760, 7
          %v763 = vshll.u32 %v677, 16
          %v765 = vor.u32 %v762, %v763
          %v767 = vshrl.u32 %v678, 16
          %v769 = vrot.slane %v767, 7
          %v770 = vshll.u32 %v678, 16
          %v772 = vor.u32 %v769, %v770
          %v774 = vshrl.u32 %v679, 16
          %v776 = vrot.slane %v774, 7
          %v777 = vshll.u32 %v679, 16
          %v779 = vor.u32 %v776, %v777
          %v781 = vshrl.u32 %v680, 16
          %v783 = vrot.slane %v781, 7
          %v784 = vshll.u32 %v680, 16
          %v786 = vor.u32 %v783, %v784
          %v788 = vshrl.u32 %v681, 16
          %v790 = vrot.slane %v788, 7
          %v791 = vshll.u32 %v681, 16
          %v793 = vor.u32 %v790, %v791
          %vm810 = vcmask 1040384
          %vm811 = vsmask.f32 256
          %vm812 = vmand %vm810, %vm811
          %v813 = vsel %vm812, 0, %v688
          %v814 = vsel %vm812, 0, %v695
          %v815 = vsel %vm812, 0, %v702
          %v816 = vsel %vm812, 0, %v709
          %v817 = vsel %vm812, 0, %v716
          %v818 = vsel %vm812, 0, %v723
          %v819 = vsel %vm812, 0, %v730
          %v820 = vsel %vm812, 0, %v737
          %v821 = vsel %vm812, 0, %v744
          %v822 = vsel %vm812, 0, %v751
          %v823 = vsel %vm812, 0, %v758
          %v824 = vsel %vm812, 0, %v765
          %v825 = vsel %vm812, 0, %v772
          %v826 = vsel %vm812, 0, %v779
          %v827 = vsel %vm812, 0, %v786
          %v828 = vsel %vm812, 0, %v793
          %v829 = vrot.slane %v686, 1
          %v830 = vor.u32 %v683, %v829
          %v831 = vrot.slane %v693, 1
          %v832 = vor.u32 %v690, %v831
          %v833 = vrot.slane %v700, 1
          %v834 = vor.u32 %v697, %v833
          %v835 = vrot.slane %v707, 1
          %v836 = vor.u32 %v704, %v835
          %v837 = vrot.slane %v714, 1
          %v838 = vor.u32 %v711, %v837
          %v839 = vrot.slane %v721, 1
          %v840 = vor.u32 %v718, %v839
          %v841 = vrot.slane %v728, 1
          %v842 = vor.u32 %v725, %v841
          %v843 = vrot.slane %v735, 1
          %v844 = vor.u32 %v732, %v843
          %v845 = vrot.slane %v742, 1
          %v846 = vor.u32 %v739, %v845
          %v847 = vrot.slane %v749, 1
          %v848 = vor.u32 %v746, %v847
          %v849 = vrot.slane %v756, 1
          %v850 = vor.u32 %v753, %v849
          %v851 = vrot.slane %v763, 1
          %v852 = vor.u32 %v760, %v851
          %v853 = vrot.slane %v770, 1
          %v854 = vor.u32 %v767, %v853
          %v855 = vrot.slane %v777, 1
          %v856 = vor.u32 %v774, %v855
          %v857 = vrot.slane %v784, 1
          %v858 = vor.u32 %v781, %v857
          %v859 = vrot.slane %v791, 1
          %v860 = vor.u32 %v788, %v859
          %vm877 = vcmask 1047552
          %vm878 = vsmask.f32 7424
          %vm879 = vmand %vm877, %vm878
          %v880 = vsel %vm879, %v830, 0
          %v881 = vsel %vm879, %v832, 0
          %v882 = vsel %vm879, %v834, 0
          %v883 = vsel %vm879, %v836, 0
          %v884 = vsel %vm879, %v838, 0
          %v885 = vsel %vm879, %v840, 0
          %v886 = vsel %vm879, %v842, 0
          %v887 = vsel %vm879, %v844, 0
          %v888 = vsel %vm879, %v846, 0
          %v889 = vsel %vm879, %v848, 0
          %v890 = vsel %vm879, %v850, 0
          %v891 = vsel %vm879, %v852, 0
          %v892 = vsel %vm879, %v854, 0
          %v893 = vsel %vm879, %v856, 0
          %v894 = vsel %vm879, %v858, 0
          %v895 = vsel %vm879, %v860, 0
          %s896 = scalar_lea.vmem [#allocation2], 24
          %897 = vst [vmem:[%s896] sm:$0xff] %v813
          %898 = vst [vmem:[%s896 + $0x8] sm:$0xff] %v666
          %899 = vst [vmem:[%s896 + $0x10] sm:$0xff] %v880
          %900 = vst [vmem:[%s896 + $0x18] sm:$0xff] %v814
          %901 = vst [vmem:[%s896 + $0x20] sm:$0xff] %v667
          %902 = vst [vmem:[%s896 + $0x28] sm:$0xff] %v881
          %903 = vst [vmem:[%s896 + $0x30] sm:$0xff] %v815
          %904 = vst [vmem:[%s896 + $0x38] sm:$0xff] %v668
          %905 = vst [vmem:[%s896 + $0x40] sm:$0xff] %v882
          %906 = vst [vmem:[%s896 + $0x48] sm:$0xff] %v816
          %907 = vst [vmem:[%s896 + $0x50] sm:$0xff] %v669
          %908 = vst [vmem:[%s896 + $0x58] sm:$0xff] %v883
          %909 = vst [vmem:[%s896 + $0x60] sm:$0xff] %v817
          %910 = vst [vmem:[%s896 + $0x68] sm:$0xff] %v670
          %911 = vst [vmem:[%s896 + $0x70] sm:$0xff] %v884
          %912 = vst [vmem:[%s896 + $0x78] sm:$0xff] %v818
          %913 = vst [vmem:[%s896 + $0x80] sm:$0xff] %v671
          %914 = vst [vmem:[%s896 + $0x88] sm:$0xff] %v885
          %915 = vst [vmem:[%s896 + $0x90] sm:$0xff] %v819
          %916 = vst [vmem:[%s896 + $0x98] sm:$0xff] %v672
          %917 = vst [vmem:[%s896 + $0xa0] sm:$0xff] %v886
          %918 = vst [vmem:[%s896 + $0xa8] sm:$0xff] %v820
          %919 = vst [vmem:[%s896 + $0xb0] sm:$0xff] %v673
          %920 = vst [vmem:[%s896 + $0xb8] sm:$0xff] %v887
          %921 = vst [vmem:[%s896 + $0xc0] sm:$0xff] %v821
          %922 = vst [vmem:[%s896 + $0xc8] sm:$0xff] %v674
          %923 = vst [vmem:[%s896 + $0xd0] sm:$0xff] %v888
          %924 = vst [vmem:[%s896 + $0xd8] sm:$0xff] %v822
          %925 = vst [vmem:[%s896 + $0xe0] sm:$0xff] %v675
          %926 = vst [vmem:[%s896 + $0xe8] sm:$0xff] %v889
          %927 = vst [vmem:[%s896 + $0xf0] sm:$0xff] %v823
          %928 = vst [vmem:[%s896 + $0xf8] sm:$0xff] %v676
          %929 = vst [vmem:[%s896 + $0x100] sm:$0xff] %v890
          %930 = vst [vmem:[%s896 + $0x108] sm:$0xff] %v824
          %931 = vst [vmem:[%s896 + $0x110] sm:$0xff] %v677
          %932 = vst [vmem:[%s896 + $0x118] sm:$0xff] %v891
          %933 = vst [vmem:[%s896 + $0x120] sm:$0xff] %v825
          %934 = vst [vmem:[%s896 + $0x128] sm:$0xff] %v678
          %935 = vst [vmem:[%s896 + $0x130] sm:$0xff] %v892
          %936 = vst [vmem:[%s896 + $0x138] sm:$0xff] %v826
          %937 = vst [vmem:[%s896 + $0x140] sm:$0xff] %v679
          %938 = vst [vmem:[%s896 + $0x148] sm:$0xff] %v893
          %939 = vst [vmem:[%s896 + $0x150] sm:$0xff] %v827
          %940 = vst [vmem:[%s896 + $0x158] sm:$0xff] %v680
          %941 = vst [vmem:[%s896 + $0x160] sm:$0xff] %v894
          %942 = vst [vmem:[%s896 + $0x168] sm:$0xff] %v828
          %943 = vst [vmem:[%s896 + $0x170] sm:$0xff] %v681
          %944 = vst [vmem:[%s896 + $0x178] sm:$0xff] %v895
          %945 = vst [vmem:[#allocation2] sm:$0xff] 0
          %946 = vst [vmem:[#allocation2 + $0x8] sm:$0xff] 0
          %947 = vst [vmem:[#allocation2 + $0x10] sm:$0xff] 0
          %s948 = scalar_lea.vmem [#allocation2], 408
          %949 = vst [vmem:[%s948] sm:$0xff] 0
          %950 = vst [vmem:[%s948 + $0x8] sm:$0xff] 0
          %951 = vst [vmem:[%s948 + $0x10] sm:$0xff] 0
        $region56: #{tpu_custom_call.1} parent=35 // pred_fallthru
          _
        %s952 = smul.u32 %s276, 3
        %s953 = smul.addr %s952, 8
        %s954 = scalar_lea.vmem [#allocation2], %s953
        %v955 = vld [vmem:[%s954] sm:$0xff]
        %v956 = vld [vmem:[%s954 + $0x8] sm:$0xff]
        %v957 = vld [vmem:[%s954 + $0x10] sm:$0xff]
        %v958 = vld [vmem:[%s954 + $0x18] sm:$0xff]
        %v959 = vld [vmem:[%s954 + $0x20] sm:$0xff]
        %v960 = vld [vmem:[%s954 + $0x28] sm:$0xff]
        %v961 = vld [vmem:[%s954 + $0x30] sm:$0xff]
        %v962 = vld [vmem:[%s954 + $0x38] sm:$0xff]
        %v963 = vld [vmem:[%s954 + $0x40] sm:$0xff]
        %v964 = vld [vmem:[%s954 + $0x48] sm:$0xff]
        %v965 = vld [vmem:[%s954 + $0x50] sm:$0xff]
        %v966 = vld [vmem:[%s954 + $0x58] sm:$0xff]
        %v967 = vld [vmem:[%s954 + $0x60] sm:$0xff]
        %v968 = vld [vmem:[%s954 + $0x68] sm:$0xff]
        %v969 = vld [vmem:[%s954 + $0x70] sm:$0xff]
        %v970 = vld [vmem:[%s954 + $0x78] sm:$0xff]
        %v971 = vld [vmem:[%s954 + $0x80] sm:$0xff]
        %v972 = vld [vmem:[%s954 + $0x88] sm:$0xff]
        %v973 = vld [vmem:[%s954 + $0x90] sm:$0xff]
        %v974 = vld [vmem:[%s954 + $0x98] sm:$0xff]
        %v975 = vld [vmem:[%s954 + $0xa0] sm:$0xff]
        %v976 = vld [vmem:[%s954 + $0xa8] sm:$0xff]
        %v977 = vld [vmem:[%s954 + $0xb0] sm:$0xff]
        %v978 = vld [vmem:[%s954 + $0xb8] sm:$0xff]
        %v979 = vld [vmem:[#allocation8] sm:$0xf]
        %v980 = vld [vmem:[#allocation8 + $0x4] sm:$0xf]
        %v981 = vld [vmem:[#allocation8 + $0x8] sm:$0xf]
        %v982 = vld [vmem:[#allocation8 + $0xc] sm:$0xf]
        %v983 = vld [vmem:[#allocation8 + $0x10] sm:$0xf]
        %v984 = vld [vmem:[#allocation8 + $0x14] sm:$0xf]
        %v985 = vld [vmem:[#allocation8 + $0x18] sm:$0xf]
        %v986 = vld [vmem:[#allocation8 + $0x1c] sm:$0xf]
        %v987 = vld [vmem:[#allocation8 + $0x20] sm:$0xf]
        %v988 = vld [vmem:[#allocation8 + $0x24] sm:$0xf]
        %v989 = vld [vmem:[#allocation8 + $0x28] sm:$0xf]
        %v990 = vld [vmem:[#allocation8 + $0x2c] sm:$0xf]
        %v991 = vld [vmem:[#allocation8 + $0x30] sm:$0xf]
        %v992 = vld [vmem:[#allocation8 + $0x34] sm:$0xf]
        %v993 = vld [vmem:[#allocation8 + $0x38] sm:$0xf]
        %v994 = vld [vmem:[#allocation8 + $0x3c] sm:$0xf]
        %v995 = vld [vmem:[#allocation8 + $0x40] sm:$0xf]
        %v996 = vld [vmem:[#allocation8 + $0x44] sm:$0xf]
        %v997 = vld [vmem:[#allocation8 + $0x48] sm:$0xf]
        %v998 = vld [vmem:[#allocation8 + $0x4c] sm:$0xf]
        %v999 = vld [vmem:[#allocation8 + $0x50] sm:$0xf]
        %v1000 = vld [vmem:[#allocation8 + $0x54] sm:$0xf]
        %v1001 = vld [vmem:[#allocation8 + $0x58] sm:$0xf]
        %v1002 = vld [vmem:[#allocation8 + $0x5c] sm:$0xf]
        %v1003 = vld [vmem:[#allocation8 + $0x60] sm:$0xf]
        %v1004 = vld [vmem:[#allocation8 + $0x64] sm:$0xf]
        %v1005 = vld [vmem:[#allocation8 + $0x68] sm:$0xf]
        %v1006 = vld [vmem:[#allocation8 + $0x6c] sm:$0xf]
        %v1007 = vld [vmem:[#allocation8 + $0x70] sm:$0xf]
        %v1008 = vld [vmem:[#allocation8 + $0x74] sm:$0xf]
        %v1009 = vld [vmem:[#allocation8 + $0x78] sm:$0xf]
        %v1010 = vld [vmem:[#allocation8 + $0x7c] sm:$0xf]
        %v1011 = vld [vmem:[#allocation8 + $0x80] sm:$0xf]
        %v1012 = vld [vmem:[#allocation8 + $0x84] sm:$0xf]
        %v1013 = vld [vmem:[#allocation8 + $0x88] sm:$0xf]
        %v1014 = vld [vmem:[#allocation8 + $0x8c] sm:$0xf]
        %v1015 = vld [vmem:[#allocation8 + $0x90] sm:$0xf]
        %v1016 = vld [vmem:[#allocation8 + $0x94] sm:$0xf]
        %v1017 = vld [vmem:[#allocation8 + $0x98] sm:$0xf]
        %v1018 = vld [vmem:[#allocation8 + $0x9c] sm:$0xf]
        %v1019 = vld [vmem:[#allocation8 + $0xa0] sm:$0xf]
        %v1020 = vld [vmem:[#allocation8 + $0xa4] sm:$0xf]
        %v1021 = vld [vmem:[#allocation8 + $0xa8] sm:$0xf]
        %v1022 = vld [vmem:[#allocation8 + $0xac] sm:$0xf]
        %v1023 = vld [vmem:[#allocation8 + $0xb0] sm:$0xf]
        %v1024 = vld [vmem:[#allocation8 + $0xb4] sm:$0xf]
        %v1025 = vld [vmem:[#allocation8 + $0xb8] sm:$0xf]
        %v1026 = vld [vmem:[#allocation8 + $0xbc] sm:$0xf]
        %s1027 = sadd.s32 %s276, 1
        %s1028 = smul.u32 %s1027, 3
        %s1029 = smul.addr %s1028, 8
        %s1030 = scalar_lea.vmem [#allocation2], %s1029
        %v1031 = vld [vmem:[%s1030] sm:$0xff]
        %v1032 = vld [vmem:[%s1030 + $0x8] sm:$0xff]
        %v1033 = vld [vmem:[%s1030 + $0x10] sm:$0xff]
        %v1034 = vld [vmem:[%s1030 + $0x18] sm:$0xff]
        %v1035 = vld [vmem:[%s1030 + $0x20] sm:$0xff]
        %v1036 = vld [vmem:[%s1030 + $0x28] sm:$0xff]
        %v1037 = vld [vmem:[%s1030 + $0x30] sm:$0xff]
        %v1038 = vld [vmem:[%s1030 + $0x38] sm:$0xff]
        %v1039 = vld [vmem:[%s1030 + $0x40] sm:$0xff]
        %v1040 = vld [vmem:[%s1030 + $0x48] sm:$0xff]
        %v1041 = vld [vmem:[%s1030 + $0x50] sm:$0xff]
        %v1042 = vld [vmem:[%s1030 + $0x58] sm:$0xff]
        %v1043 = vld [vmem:[%s1030 + $0x60] sm:$0xff]
        %v1044 = vld [vmem:[%s1030 + $0x68] sm:$0xff]
        %v1045 = vld [vmem:[%s1030 + $0x70] sm:$0xff]
        %v1046 = vld [vmem:[%s1030 + $0x78] sm:$0xff]
        %v1047 = vld [vmem:[%s1030 + $0x80] sm:$0xff]
        %v1048 = vld [vmem:[%s1030 + $0x88] sm:$0xff]
        %v1049 = vld [vmem:[%s1030 + $0x90] sm:$0xff]
        %v1050 = vld [vmem:[%s1030 + $0x98] sm:$0xff]
        %v1051 = vld [vmem:[%s1030 + $0xa0] sm:$0xff]
        %v1052 = vld [vmem:[%s1030 + $0xa8] sm:$0xff]
        %v1053 = vld [vmem:[%s1030 + $0xb0] sm:$0xff]
        %v1054 = vld [vmem:[%s1030 + $0xb8] sm:$0xff]
        %s1055 = scalar_lea.vmem [#allocation8], 192
        %v1056 = vld [vmem:[%s1055] sm:$0xf]
        %v1057 = vld [vmem:[%s1055 + $0x4] sm:$0xf]
        %v1058 = vld [vmem:[%s1055 + $0x8] sm:$0xf]
        %v1059 = vld [vmem:[%s1055 + $0xc] sm:$0xf]
        %v1060 = vld [vmem:[%s1055 + $0x10] sm:$0xf]
        %v1061 = vld [vmem:[%s1055 + $0x14] sm:$0xf]
        %v1062 = vld [vmem:[%s1055 + $0x18] sm:$0xf]
        %v1063 = vld [vmem:[%s1055 + $0x1c] sm:$0xf]
        %v1064 = vld [vmem:[%s1055 + $0x20] sm:$0xf]
        %v1065 = vld [vmem:[%s1055 + $0x24] sm:$0xf]
        %v1066 = vld [vmem:[%s1055 + $0x28] sm:$0xf]
        %v1067 = vld [vmem:[%s1055 + $0x2c] sm:$0xf]
        %v1068 = vld [vmem:[%s1055 + $0x30] sm:$0xf]
        %v1069 = vld [vmem:[%s1055 + $0x34] sm:$0xf]
        %v1070 = vld [vmem:[%s1055 + $0x38] sm:$0xf]
        %v1071 = vld [vmem:[%s1055 + $0x3c] sm:$0xf]
        %v1072 = vld [vmem:[%s1055 + $0x40] sm:$0xf]
        %v1073 = vld [vmem:[%s1055 + $0x44] sm:$0xf]
        %v1074 = vld [vmem:[%s1055 + $0x48] sm:$0xf]
        %v1075 = vld [vmem:[%s1055 + $0x4c] sm:$0xf]
        %v1076 = vld [vmem:[%s1055 + $0x50] sm:$0xf]
        %v1077 = vld [vmem:[%s1055 + $0x54] sm:$0xf]
        %v1078 = vld [vmem:[%s1055 + $0x58] sm:$0xf]
        %v1079 = vld [vmem:[%s1055 + $0x5c] sm:$0xf]
        %v1080 = vld [vmem:[%s1055 + $0x60] sm:$0xf]
        %v1081 = vld [vmem:[%s1055 + $0x64] sm:$0xf]
        %v1082 = vld [vmem:[%s1055 + $0x68] sm:$0xf]
        %v1083 = vld [vmem:[%s1055 + $0x6c] sm:$0xf]
        %v1084 = vld [vmem:[%s1055 + $0x70] sm:$0xf]
        %v1085 = vld [vmem:[%s1055 + $0x74] sm:$0xf]
        %v1086 = vld [vmem:[%s1055 + $0x78] sm:$0xf]
        %v1087 = vld [vmem:[%s1055 + $0x7c] sm:$0xf]
        %v1088 = vld [vmem:[%s1055 + $0x80] sm:$0xf]
        %v1089 = vld [vmem:[%s1055 + $0x84] sm:$0xf]
        %v1090 = vld [vmem:[%s1055 + $0x88] sm:$0xf]
        %v1091 = vld [vmem:[%s1055 + $0x8c] sm:$0xf]
        %v1092 = vld [vmem:[%s1055 + $0x90] sm:$0xf]
        %v1093 = vld [vmem:[%s1055 + $0x94] sm:$0xf]
        %v1094 = vld [vmem:[%s1055 + $0x98] sm:$0xf]
        %v1095 = vld [vmem:[%s1055 + $0x9c] sm:$0xf]
        %v1096 = vld [vmem:[%s1055 + $0xa0] sm:$0xf]
        %v1097 = vld [vmem:[%s1055 + $0xa4] sm:$0xf]
        %v1098 = vld [vmem:[%s1055 + $0xa8] sm:$0xf]
        %v1099 = vld [vmem:[%s1055 + $0xac] sm:$0xf]
        %v1100 = vld [vmem:[%s1055 + $0xb0] sm:$0xf]
        %v1101 = vld [vmem:[%s1055 + $0xb4] sm:$0xf]
        %v1102 = vld [vmem:[%s1055 + $0xb8] sm:$0xf]
        %v1103 = vld [vmem:[%s1055 + $0xbc] sm:$0xf]
        %v1152 = vunpack.c.l.b16 %v1056
        %v1153 = vunpack.c.l.b16 %v1057
        %v1154 = vunpack.c.l.b16 %v1058
        %v1155 = vunpack.c.l.b16 %v1059
        %v1156 = vunpack.c.l.b16 %v1060
        %v1157 = vunpack.c.l.b16 %v1061
        %v1158 = vunpack.c.l.b16 %v1062
        %v1159 = vunpack.c.l.b16 %v1063
        %v1160 = vunpack.c.l.b16 %v1064
        %v1161 = vunpack.c.l.b16 %v1065
        %v1162 = vunpack.c.l.b16 %v1066
        %v1163 = vunpack.c.l.b16 %v1067
        %v1164 = vunpack.c.l.b16 %v1068
        %v1165 = vunpack.c.l.b16 %v1069
        %v1166 = vunpack.c.l.b16 %v1070
        %v1167 = vunpack.c.l.b16 %v1071
        %v1168 = vunpack.c.l.b16 %v1072
        %v1169 = vunpack.c.l.b16 %v1073
        %v1170 = vunpack.c.l.b16 %v1074
        %v1171 = vunpack.c.l.b16 %v1075
        %v1172 = vunpack.c.l.b16 %v1076
        %v1173 = vunpack.c.l.b16 %v1077
        %v1174 = vunpack.c.l.b16 %v1078
        %v1175 = vunpack.c.l.b16 %v1079
        %v1176 = vunpack.c.l.b16 %v1080
        %v1177 = vunpack.c.l.b16 %v1081
        %v1178 = vunpack.c.l.b16 %v1082
        %v1179 = vunpack.c.l.b16 %v1083
        %v1180 = vunpack.c.l.b16 %v1084
        %v1181 = vunpack.c.l.b16 %v1085
        %v1182 = vunpack.c.l.b16 %v1086
        %v1183 = vunpack.c.l.b16 %v1087
        %v1184 = vunpack.c.l.b16 %v1088
        %v1185 = vunpack.c.l.b16 %v1089
        %v1186 = vunpack.c.l.b16 %v1090
        %v1187 = vunpack.c.l.b16 %v1091
        %v1188 = vunpack.c.l.b16 %v1092
        %v1189 = vunpack.c.l.b16 %v1093
        %v1190 = vunpack.c.l.b16 %v1094
        %v1191 = vunpack.c.l.b16 %v1095
        %v1192 = vunpack.c.l.b16 %v1096
        %v1193 = vunpack.c.l.b16 %v1097
        %v1194 = vunpack.c.l.b16 %v1098
        %v1195 = vunpack.c.l.b16 %v1099
        %v1196 = vunpack.c.l.b16 %v1100
        %v1197 = vunpack.c.l.b16 %v1101
        %v1198 = vunpack.c.l.b16 %v1102
        %v1199 = vunpack.c.l.b16 %v1103
        %v1200 = vpack.c.b16 %v1153, %v1152
        %v1201 = vpack.c.b16 %v1155, %v1154
        %v1202 = vpack.c.b16 %v1157, %v1156
        %v1203 = vpack.c.b16 %v1159, %v1158
        %v1204 = vpack.c.b16 %v1161, %v1160
        %v1205 = vpack.c.b16 %v1163, %v1162
        %v1206 = vpack.c.b16 %v1165, %v1164
        %v1207 = vpack.c.b16 %v1167, %v1166
        %v1208 = vpack.c.b16 %v1169, %v1168
        %v1209 = vpack.c.b16 %v1171, %v1170
        %v1210 = vpack.c.b16 %v1173, %v1172
        %v1211 = vpack.c.b16 %v1175, %v1174
        %v1212 = vpack.c.b16 %v1177, %v1176
        %v1213 = vpack.c.b16 %v1179, %v1178
        %v1214 = vpack.c.b16 %v1181, %v1180
        %v1215 = vpack.c.b16 %v1183, %v1182
        %v1216 = vpack.c.b16 %v1185, %v1184
        %v1217 = vpack.c.b16 %v1187, %v1186
        %v1218 = vpack.c.b16 %v1189, %v1188
        %v1219 = vpack.c.b16 %v1191, %v1190
        %v1220 = vpack.c.b16 %v1193, %v1192
        %v1221 = vpack.c.b16 %v1195, %v1194
        %v1222 = vpack.c.b16 %v1197, %v1196
        %v1223 = vpack.c.b16 %v1199, %v1198
        %1248 = vmatprep.subr.bf16.mxu0 0
        %1249 = vmatpush1.bf16.msra.mxu0 %v1200
        %1250 = vmatprep.subr.bf16.mxu0 0
        %1251 = vmatpush1.bf16.msra.mxu0 %v1201
        %1252 = vmatprep.subr.bf16.mxu0 0
        %1253 = vmatpush1.bf16.msra.mxu0 %v1202
        %1254 = vmatprep.subr.bf16.mxu0 0
        %1255 = vmatpush1.bf16.msra.mxu0 %v1203
        %1256 = vmatprep.subr.bf16.mxu0 0
        %1257 = vmatpush1.bf16.msra.mxu0 %v1204
        %1258 = vmatprep.subr.bf16.mxu0 0
        %1259 = vmatpush1.bf16.msra.mxu0 %v1205
        %1260 = vmatprep.subr.bf16.mxu0 0
        %1261 = vmatpush1.bf16.msra.mxu0 %v1206
        %1262 = vmatprep.subr.bf16.mxu0 0
        %1263 = vmatpush1.bf16.msra.mxu0 %v1207
        %1264 = vmatprep.subr.bf16.mxu0 0
        %1265 = vmatpush1.bf16.msra.mxu0 %v1208
        %1266 = vmatprep.subr.bf16.mxu0 0
        %1267 = vmatpush1.bf16.msra.mxu0 %v1209
        %1268 = vmatprep.subr.bf16.mxu0 0
        %1269 = vmatpush1.bf16.msra.mxu0 %v1210
        %1270 = vmatprep.subr.bf16.mxu0 0
        %1271 = vmatpush1.bf16.msra.mxu0 %v1211
        %1272 = vmatprep.subr.bf16.mxu0 0
        %1273 = vmatpush1.bf16.msra.mxu0 %v1212
        %1274 = vmatprep.subr.bf16.mxu0 0
        %1275 = vmatpush1.bf16.msra.mxu0 %v1213
        %1276 = vmatprep.subr.bf16.mxu0 0
        %1277 = vmatpush1.bf16.msra.mxu0 %v1214
        %1278 = vmatprep.subr.bf16.mxu0 0
        %1279 = vmatpush1.bf16.msra.mxu0 %v1215
        %1280 = vmatprep.mubr.bf16.mxu0 %v1032
        %1281 = vmatmul.mubr.bf16.gmra.mrb[0].mxu0 %v1031
        %v1282 = vpop.f32.mrb[0].mxu0
        %v1283 = vadd.f32 0.0, %v1282
        %v1284 = vpop.f32.mrb[0].mxu0
        %v1285 = vpop.f32.mrb[0].mxu0
        %v1286 = vadd.f32 0.0, %v1285
        %v1287 = vpop.f32.mrb[0].mxu0
        %1288 = vmatprep.mubr.bf16.mxu0 %v1035
        %1289 = vmatmul.mubr.bf16.gmra.mrb[0].mxu0 %v1034
        %v1290 = vpop.f32.mrb[0].mxu0
        %v1291 = vadd.f32 0.0, %v1290
        %v1292 = vpop.f32.mrb[0].mxu0
        %v1293 = vpop.f32.mrb[0].mxu0
        %v1294 = vadd.f32 0.0, %v1293
        %v1295 = vpop.f32.mrb[0].mxu0
        %1296 = vmatprep.mubr.bf16.mxu0 %v1038
        %1297 = vmatmul.mubr.bf16.gmra.mrb[0].mxu0 %v1037
        %v1298 = vpop.f32.mrb[0].mxu0
        %v1299 = vadd.f32 0.0, %v1298
        %v1300 = vpop.f32.mrb[0].mxu0
        %v1301 = vpop.f32.mrb[0].mxu0
        %v1302 = vadd.f32 0.0, %v1301
        %v1303 = vpop.f32.mrb[0].mxu0
        %1304 = vmatprep.mubr.bf16.mxu0 %v1041
        %1305 = vmatmul.mubr.bf16.gmra.mrb[0].mxu0 %v1040
        %v1306 = vpop.f32.mrb[0].mxu0
        %v1307 = vadd.f32 0.0, %v1306
        %v1308 = vpop.f32.mrb[0].mxu0
        %v1309 = vpop.f32.mrb[0].mxu0
        %v1310 = vadd.f32 0.0, %v1309
        %v1311 = vpop.f32.mrb[0].mxu0
        %1312 = vmatprep.mubr.bf16.mxu0 %v1044
        %1313 = vmatmul.mubr.bf16.gmra.mrb[0].mxu0 %v1043
        %v1314 = vpop.f32.mrb[0].mxu0
        %v1315 = vadd.f32 0.0, %v1314
        %v1316 = vpop.f32.mrb[0].mxu0
        %v1317 = vpop.f32.mrb[0].mxu0
        %v1318 = vadd.f32 0.0, %v1317
        %v1319 = vpop.f32.mrb[0].mxu0
        %1320 = vmatprep.mubr.bf16.mxu0 %v1047
        %1321 = vmatmul.mubr.bf16.gmra.mrb[0].mxu0 %v1046
        %v1322 = vpop.f32.mrb[0].mxu0
        %v1323 = vadd.f32 0.0, %v1322
        %v1324 = vpop.f32.mrb[0].mxu0
        %v1325 = vpop.f32.mrb[0].mxu0
        %v1326 = vadd.f32 0.0, %v1325
        %v1327 = vpop.f32.mrb[0].mxu0
        %1328 = vmatprep.mubr.bf16.mxu0 %v1050
        %1329 = vmatmul.mubr.bf16.gmra.mrb[0].mxu0 %v1049
        %v1330 = vpop.f32.mrb[0].mxu0
        %v1331 = vadd.f32 0.0, %v1330
        %v1332 = vpop.f32.mrb[0].mxu0
        %v1333 = vpop.f32.mrb[0].mxu0
        %v1334 = vadd.f32 0.0, %v1333
        %v1335 = vpop.f32.mrb[0].mxu0
        %1336 = vmatprep.mubr.bf16.mxu0 %v1053
        %1337 = vmatmul.mubr.bf16.gmra.mrb[0].mxu0 %v1052
        %v1338 = vpop.f32.mrb[0].mxu0
        %v1339 = vadd.f32 0.0, %v1338
        %v1340 = vpop.f32.mrb[0].mxu0
        %v1341 = vpop.f32.mrb[0].mxu0
        %v1342 = vadd.f32 0.0, %v1341
        %v1343 = vpop.f32.mrb[0].mxu0
        %1344 = vdwg.mxu0
        %1345 = vmatprep.subr.bf16.mxu0 0
        %1346 = vmatpush1.bf16.msra.mxu0 %v1216
        %1347 = vmatprep.subr.bf16.mxu0 0
        %1348 = vmatpush1.bf16.msra.mxu0 %v1217
        %1349 = vmatprep.subr.bf16.mxu0 0
        %1350 = vmatpush1.bf16.msra.mxu0 %v1218
        %1351 = vmatprep.subr.bf16.mxu0 0
        %1352 = vmatpush1.bf16.msra.mxu0 %v1219
        %1353 = vmatprep.subr.bf16.mxu0 0
        %1354 = vmatpush1.bf16.msra.mxu0 %v1220
        %1355 = vmatprep.subr.bf16.mxu0 0
        %1356 = vmatpush1.bf16.msra.mxu0 %v1221
        %1357 = vmatprep.subr.bf16.mxu0 0
        %1358 = vmatpush1.bf16.msra.mxu0 %v1222
        %1359 = vmatprep.subr.bf16.mxu0 0
        %1360 = vmatpush1.bf16.msra.mxu0 %v1223
        %1361 = vmatprep.subr.bf16.mxu0 0
        %1362 = vmatpush1.bf16.msra.mxu0 0
        %1363 = vmatprep.subr.bf16.mxu0 0
        %1364 = vmatpush1.bf16.msra.mxu0 0
        %1365 = vmatprep.subr.bf16.mxu0 0
        %1366 = vmatpush1.bf16.msra.mxu0 0
        %1367 = vmatprep.subr.bf16.mxu0 0
        %1368 = vmatpush1.bf16.msra.mxu0 0
        %1369 = vmatprep.subr.bf16.mxu0 0
        %1370 = vmatpush1.bf16.msra.mxu0 0
        %1371 = vmatprep.subr.bf16.mxu0 0
        %1372 = vmatpush1.bf16.msra.mxu0 0
        %1373 = vmatprep.subr.bf16.mxu0 0
        %1374 = vmatpush1.bf16.msra.mxu0 0
        %1375 = vmatprep.subr.bf16.mxu0 0
        %1376 = vmatpush1.bf16.msra.mxu0 0
        %1377 = vmatprep.mubr.bf16.mxu0 0
        %1378 = vmatmul.mubr.bf16.gmra.mrb[0].mxu0 %v1033
        %v1379 = vpop.f32.mrb[0].mxu0
        %v1380 = vadd.f32 %v1283, %v1379
        %v1381 = vpop.f32.mrb[0].mxu0
        %v1382 = vpop.f32.mrb[0].mxu0
        %v1383 = vadd.f32 %v1286, %v1382
        %v1384 = vpop.f32.mrb[0].mxu0
        %1385 = vmatprep.mubr.bf16.mxu0 0
        %1386 = vmatmul.mubr.bf16.gmra.mrb[0].mxu0 %v1036
        %v1387 = vpop.f32.mrb[0].mxu0
        %v1388 = vadd.f32 %v1291, %v1387
        %v1389 = vpop.f32.mrb[0].mxu0
        %v1390 = vpop.f32.mrb[0].mxu0
        %v1391 = vadd.f32 %v1294, %v1390
        %v1392 = vpop.f32.mrb[0].mxu0
        %1393 = vmatprep.mubr.bf16.mxu0 0
        %1394 = vmatmul.mubr.bf16.gmra.mrb[0].mxu0 %v1039
        %v1395 = vpop.f32.mrb[0].mxu0
        %v1396 = vadd.f32 %v1299, %v1395
        %v1397 = vpop.f32.mrb[0].mxu0
        %v1398 = vpop.f32.mrb[0].mxu0
        %v1399 = vadd.f32 %v1302, %v1398
        %v1400 = vpop.f32.mrb[0].mxu0
        %1401 = vmatprep.mubr.bf16.mxu0 0
        %1402 = vmatmul.mubr.bf16.gmra.mrb[0].mxu0 %v1042
        %v1403 = vpop.f32.mrb[0].mxu0
        %v1404 = vadd.f32 %v1307, %v1403
        %v1405 = vpop.f32.mrb[0].mxu0
        %v1406 = vpop.f32.mrb[0].mxu0
        %v1407 = vadd.f32 %v1310, %v1406
        %v1408 = vpop.f32.mrb[0].mxu0
        %1409 = vmatprep.mubr.bf16.mxu0 0
        %1410 = vmatmul.mubr.bf16.gmra.mrb[0].mxu0 %v1045
        %v1411 = vpop.f32.mrb[0].mxu0
        %v1412 = vadd.f32 %v1315, %v1411
        %v1413 = vpop.f32.mrb[0].mxu0
        %v1414 = vpop.f32.mrb[0].mxu0
        %v1415 = vadd.f32 %v1318, %v1414
        %v1416 = vpop.f32.mrb[0].mxu0
        %1417 = vmatprep.mubr.bf16.mxu0 0
        %1418 = vmatmul.mubr.bf16.gmra.mrb[0].mxu0 %v1048
        %v1419 = vpop.f32.mrb[0].mxu0
        %v1420 = vadd.f32 %v1323, %v1419
        %v1421 = vpop.f32.mrb[0].mxu0
        %v1422 = vpop.f32.mrb[0].mxu0
        %v1423 = vadd.f32 %v1326, %v1422
        %v1424 = vpop.f32.mrb[0].mxu0
        %1425 = vmatprep.mubr.bf16.mxu0 0
        %1426 = vmatmul.mubr.bf16.gmra.mrb[0].mxu0 %v1051
        %v1427 = vpop.f32.mrb[0].mxu0
        %v1428 = vadd.f32 %v1331, %v1427
        %v1429 = vpop.f32.mrb[0].mxu0
        %v1430 = vpop.f32.mrb[0].mxu0
        %v1431 = vadd.f32 %v1334, %v1430
        %v1432 = vpop.f32.mrb[0].mxu0
        %1433 = vmatprep.mubr.bf16.mxu0 0
        %1434 = vmatmul.mubr.bf16.gmra.mrb[0].mxu0 %v1054
        %v1435 = vpop.f32.mrb[0].mxu0
        %v1436 = vadd.f32 %v1339, %v1435
        %v1437 = vpop.f32.mrb[0].mxu0
        %v1438 = vpop.f32.mrb[0].mxu0
        %v1439 = vadd.f32 %v1342, %v1438
        %v1440 = vpop.f32.mrb[0].mxu0
        %1441 = vdwg.mxu0
        %v1490 = vunpack.c.l.b16 %v979
        %v1491 = vunpack.c.l.b16 %v980
        %v1492 = vunpack.c.l.b16 %v981
        %v1493 = vunpack.c.l.b16 %v982
        %v1494 = vunpack.c.l.b16 %v983
        %v1495 = vunpack.c.l.b16 %v984
        %v1496 = vunpack.c.l.b16 %v985
        %v1497 = vunpack.c.l.b16 %v986
        %v1498 = vunpack.c.l.b16 %v987
        %v1499 = vunpack.c.l.b16 %v988
        %v1500 = vunpack.c.l.b16 %v989
        %v1501 = vunpack.c.l.b16 %v990
        %v1502 = vunpack.c.l.b16 %v991
        %v1503 = vunpack.c.l.b16 %v992
        %v1504 = vunpack.c.l.b16 %v993
        %v1505 = vunpack.c.l.b16 %v994
        %v1506 = vunpack.c.l.b16 %v995
        %v1507 = vunpack.c.l.b16 %v996
        %v1508 = vunpack.c.l.b16 %v997
        %v1509 = vunpack.c.l.b16 %v998
        %v1510 = vunpack.c.l.b16 %v999
        %v1511 = vunpack.c.l.b16 %v1000
        %v1512 = vunpack.c.l.b16 %v1001
        %v1513 = vunpack.c.l.b16 %v1002
        %v1514 = vunpack.c.l.b16 %v1003
        %v1515 = vunpack.c.l.b16 %v1004
        %v1516 = vunpack.c.l.b16 %v1005
        %v1517 = vunpack.c.l.b16 %v1006
        %v1518 = vunpack.c.l.b16 %v1007
        %v1519 = vunpack.c.l.b16 %v1008
        %v1520 = vunpack.c.l.b16 %v1009
        %v1521 = vunpack.c.l.b16 %v1010
        %v1522 = vunpack.c.l.b16 %v1011
        %v1523 = vunpack.c.l.b16 %v1012
        %v1524 = vunpack.c.l.b16 %v1013
        %v1525 = vunpack.c.l.b16 %v1014
        %v1526 = vunpack.c.l.b16 %v1015
        %v1527 = vunpack.c.l.b16 %v1016
        %v1528 = vunpack.c.l.b16 %v1017
        %v1529 = vunpack.c.l.b16 %v1018
        %v1530 = vunpack.c.l.b16 %v1019
        %v1531 = vunpack.c.l.b16 %v1020
        %v1532 = vunpack.c.l.b16 %v1021
        %v1533 = vunpack.c.l.b16 %v1022
        %v1534 = vunpack.c.l.b16 %v1023
        %v1535 = vunpack.c.l.b16 %v1024
        %v1536 = vunpack.c.l.b16 %v1025
        %v1537 = vunpack.c.l.b16 %v1026
        %v1538 = vpack.c.b16 %v1491, %v1490
        %v1539 = vpack.c.b16 %v1493, %v1492
        %v1540 = vpack.c.b16 %v1495, %v1494
        %v1541 = vpack.c.b16 %v1497, %v1496
        %v1542 = vpack.c.b16 %v1499, %v1498
        %v1543 = vpack.c.b16 %v1501, %v1500
        %v1544 = vpack.c.b16 %v1503, %v1502
        %v1545 = vpack.c.b16 %v1505, %v1504
        %v1546 = vpack.c.b16 %v1507, %v1506
        %v1547 = vpack.c.b16 %v1509, %v1508
        %v1548 = vpack.c.b16 %v1511, %v1510
        %v1549 = vpack.c.b16 %v1513, %v1512
        %v1550 = vpack.c.b16 %v1515, %v1514
        %v1551 = vpack.c.b16 %v1517, %v1516
        %v1552 = vpack.c.b16 %v1519, %v1518
        %v1553 = vpack.c.b16 %v1521, %v1520
        %v1554 = vpack.c.b16 %v1523, %v1522
        %v1555 = vpack.c.b16 %v1525, %v1524
        %v1556 = vpack.c.b16 %v1527, %v1526
        %v1557 = vpack.c.b16 %v1529, %v1528
        %v1558 = vpack.c.b16 %v1531, %v1530
        %v1559 = vpack.c.b16 %v1533, %v1532
        %v1560 = vpack.c.b16 %v1535, %v1534
        %v1561 = vpack.c.b16 %v1537, %v1536
        %1586 = vmatprep.subr.bf16.mxu0 0
        %1587 = vmatpush1.bf16.msra.mxu0 %v1538
        %1588 = vmatprep.subr.bf16.mxu0 0
        %1589 = vmatpush1.bf16.msra.mxu0 %v1539
        %1590 = vmatprep.subr.bf16.mxu0 0
        %1591 = vmatpush1.bf16.msra.mxu0 %v1540
        %1592 = vmatprep.subr.bf16.mxu0 0
        %1593 = vmatpush1.bf16.msra.mxu0 %v1541
        %1594 = vmatprep.subr.bf16.mxu0 0
        %1595 = vmatpush1.bf16.msra.mxu0 %v1542
        %1596 = vmatprep.subr.bf16.mxu0 0
        %1597 = vmatpush1.bf16.msra.mxu0 %v1543
        %1598 = vmatprep.subr.bf16.mxu0 0
        %1599 = vmatpush1.bf16.msra.mxu0 %v1544
        %1600 = vmatprep.subr.bf16.mxu0 0
        %1601 = vmatpush1.bf16.msra.mxu0 %v1545
        %1602 = vmatprep.subr.bf16.mxu0 0
        %1603 = vmatpush1.bf16.msra.mxu0 %v1546
        %1604 = vmatprep.subr.bf16.mxu0 0
        %1605 = vmatpush1.bf16.msra.mxu0 %v1547
        %1606 = vmatprep.subr.bf16.mxu0 0
        %1607 = vmatpush1.bf16.msra.mxu0 %v1548
        %1608 = vmatprep.subr.bf16.mxu0 0
        %1609 = vmatpush1.bf16.msra.mxu0 %v1549
        %1610 = vmatprep.subr.bf16.mxu0 0
        %1611 = vmatpush1.bf16.msra.mxu0 %v1550
        %1612 = vmatprep.subr.bf16.mxu0 0
        %1613 = vmatpush1.bf16.msra.mxu0 %v1551
        %1614 = vmatprep.subr.bf16.mxu0 0
        %1615 = vmatpush1.bf16.msra.mxu0 %v1552
        %1616 = vmatprep.subr.bf16.mxu0 0
        %1617 = vmatpush1.bf16.msra.mxu0 %v1553
        %1618 = vmatprep.mubr.bf16.mxu0 %v956
        %1619 = vmatmul.mubr.bf16.gmra.mrb[0].mxu0 %v955
        %v1620 = vpop.f32.mrb[0].mxu0
        %v1621 = vadd.f32 %v1380, %v1620
        %v1622 = vpop.f32.mrb[0].mxu0
        %v1623 = vpop.f32.mrb[0].mxu0
        %v1624 = vadd.f32 %v1383, %v1623
        %v1625 = vpop.f32.mrb[0].mxu0
        %1626 = vmatprep.mubr.bf16.mxu0 %v959
        %1627 = vmatmul.mubr.bf16.gmra.mrb[0].mxu0 %v958
        %v1628 = vpop.f32.mrb[0].mxu0
        %v1629 = vadd.f32 %v1388, %v1628
        %v1630 = vpop.f32.mrb[0].mxu0
        %v1631 = vpop.f32.mrb[0].mxu0
        %v1632 = vadd.f32 %v1391, %v1631
        %v1633 = vpop.f32.mrb[0].mxu0
        %1634 = vmatprep.mubr.bf16.mxu0 %v962
        %1635 = vmatmul.mubr.bf16.gmra.mrb[0].mxu0 %v961
        %v1636 = vpop.f32.mrb[0].mxu0
        %v1637 = vadd.f32 %v1396, %v1636
        %v1638 = vpop.f32.mrb[0].mxu0
        %v1639 = vpop.f32.mrb[0].mxu0
        %v1640 = vadd.f32 %v1399, %v1639
        %v1641 = vpop.f32.mrb[0].mxu0
        %1642 = vmatprep.mubr.bf16.mxu0 %v965
        %1643 = vmatmul.mubr.bf16.gmra.mrb[0].mxu0 %v964
        %v1644 = vpop.f32.mrb[0].mxu0
        %v1645 = vadd.f32 %v1404, %v1644
        %v1646 = vpop.f32.mrb[0].mxu0
        %v1647 = vpop.f32.mrb[0].mxu0
        %v1648 = vadd.f32 %v1407, %v1647
        %v1649 = vpop.f32.mrb[0].mxu0
        %1650 = vmatprep.mubr.bf16.mxu0 %v968
        %1651 = vmatmul.mubr.bf16.gmra.mrb[0].mxu0 %v967
        %v1652 = vpop.f32.mrb[0].mxu0
        %v1653 = vadd.f32 %v1412, %v1652
        %v1654 = vpop.f32.mrb[0].mxu0
        %v1655 = vpop.f32.mrb[0].mxu0
        %v1656 = vadd.f32 %v1415, %v1655
        %v1657 = vpop.f32.mrb[0].mxu0
        %1658 = vmatprep.mubr.bf16.mxu0 %v971
        %1659 = vmatmul.mubr.bf16.gmra.mrb[0].mxu0 %v970
        %v1660 = vpop.f32.mrb[0].mxu0
        %v1661 = vadd.f32 %v1420, %v1660
        %v1662 = vpop.f32.mrb[0].mxu0
        %v1663 = vpop.f32.mrb[0].mxu0
        %v1664 = vadd.f32 %v1423, %v1663
        %v1665 = vpop.f32.mrb[0].mxu0
        %1666 = vmatprep.mubr.bf16.mxu0 %v974
        %1667 = vmatmul.mubr.bf16.gmra.mrb[0].mxu0 %v973
        %v1668 = vpop.f32.mrb[0].mxu0
        %v1669 = vadd.f32 %v1428, %v1668
        %v1670 = vpop.f32.mrb[0].mxu0
        %v1671 = vpop.f32.mrb[0].mxu0
        %v1672 = vadd.f32 %v1431, %v1671
        %v1673 = vpop.f32.mrb[0].mxu0
        %1674 = vmatprep.mubr.bf16.mxu0 %v977
        %1675 = vmatmul.mubr.bf16.gmra.mrb[0].mxu0 %v976
        %v1676 = vpop.f32.mrb[0].mxu0
        %v1677 = vadd.f32 %v1436, %v1676
        %v1678 = vpop.f32.mrb[0].mxu0
        %v1679 = vpop.f32.mrb[0].mxu0
        %v1680 = vadd.f32 %v1439, %v1679
        %v1681 = vpop.f32.mrb[0].mxu0
        %1682 = vdwg.mxu0
        %1683 = vmatprep.subr.bf16.mxu0 0
        %1684 = vmatpush1.bf16.msra.mxu0 %v1554
        %1685 = vmatprep.subr.bf16.mxu0 0
        %1686 = vmatpush1.bf16.msra.mxu0 %v1555
        %1687 = vmatprep.subr.bf16.mxu0 0
        %1688 = vmatpush1.bf16.msra.mxu0 %v1556
        %1689 = vmatprep.subr.bf16.mxu0 0
        %1690 = vmatpush1.bf16.msra.mxu0 %v1557
        %1691 = vmatprep.subr.bf16.mxu0 0
        %1692 = vmatpush1.bf16.msra.mxu0 %v1558
        %1693 = vmatprep.subr.bf16.mxu0 0
        %1694 = vmatpush1.bf16.msra.mxu0 %v1559
        %1695 = vmatprep.subr.bf16.mxu0 0
        %1696 = vmatpush1.bf16.msra.mxu0 %v1560
        %1697 = vmatprep.subr.bf16.mxu0 0
        %1698 = vmatpush1.bf16.msra.mxu0 %v1561
        %1699 = vmatprep.subr.bf16.mxu0 0
        %1700 = vmatpush1.bf16.msra.mxu0 0
        %1701 = vmatprep.subr.bf16.mxu0 0
        %1702 = vmatpush1.bf16.msra.mxu0 0
        %1703 = vmatprep.subr.bf16.mxu0 0
        %1704 = vmatpush1.bf16.msra.mxu0 0
        %1705 = vmatprep.subr.bf16.mxu0 0
        %1706 = vmatpush1.bf16.msra.mxu0 0
        %1707 = vmatprep.subr.bf16.mxu0 0
        %1708 = vmatpush1.bf16.msra.mxu0 0
        %1709 = vmatprep.subr.bf16.mxu0 0
        %1710 = vmatpush1.bf16.msra.mxu0 0
        %1711 = vmatprep.subr.bf16.mxu0 0
        %1712 = vmatpush1.bf16.msra.mxu0 0
        %1713 = vmatprep.subr.bf16.mxu0 0
        %1714 = vmatpush1.bf16.msra.mxu0 0
        %1715 = vmatprep.mubr.bf16.mxu0 0
        %1716 = vmatmul.mubr.bf16.gmra.mrb[0].mxu0 %v957
        %v1717 = vpop.f32.mrb[0].mxu0
        %v1718 = vadd.f32 %v1621, %v1717
        %v1719 = vpop.f32.mrb[0].mxu0
        %v1720 = vpop.f32.mrb[0].mxu0
        %v1721 = vadd.f32 %v1624, %v1720
        %v1722 = vpop.f32.mrb[0].mxu0
        %1723 = vmatprep.mubr.bf16.mxu0 0
        %1724 = vmatmul.mubr.bf16.gmra.mrb[0].mxu0 %v960
        %v1725 = vpop.f32.mrb[0].mxu0
        %v1726 = vadd.f32 %v1629, %v1725
        %v1727 = vpop.f32.mrb[0].mxu0
        %v1728 = vpop.f32.mrb[0].mxu0
        %v1729 = vadd.f32 %v1632, %v1728
        %v1730 = vpop.f32.mrb[0].mxu0
        %1731 = vmatprep.mubr.bf16.mxu0 0
        %1732 = vmatmul.mubr.bf16.gmra.mrb[0].mxu0 %v963
        %v1733 = vpop.f32.mrb[0].mxu0
        %v1734 = vadd.f32 %v1637, %v1733
        %v1735 = vpop.f32.mrb[0].mxu0
        %v1736 = vpop.f32.mrb[0].mxu0
        %v1737 = vadd.f32 %v1640, %v1736
        %v1738 = vpop.f32.mrb[0].mxu0
        %1739 = vmatprep.mubr.bf16.mxu0 0
        %1740 = vmatmul.mubr.bf16.gmra.mrb[0].mxu0 %v966
        %v1741 = vpop.f32.mrb[0].mxu0
        %v1742 = vadd.f32 %v1645, %v1741
        %v1743 = vpop.f32.mrb[0].mxu0
        %v1744 = vpop.f32.mrb[0].mxu0
        %v1745 = vadd.f32 %v1648, %v1744
        %v1746 = vpop.f32.mrb[0].mxu0
        %1747 = vmatprep.mubr.bf16.mxu0 0
        %1748 = vmatmul.mubr.bf16.gmra.mrb[0].mxu0 %v969
        %v1749 = vpop.f32.mrb[0].mxu0
        %v1750 = vadd.f32 %v1653, %v1749
        %v1751 = vpop.f32.mrb[0].mxu0
        %v1752 = vpop.f32.mrb[0].mxu0
        %v1753 = vadd.f32 %v1656, %v1752
        %v1754 = vpop.f32.mrb[0].mxu0
        %1755 = vmatprep.mubr.bf16.mxu0 0
        %1756 = vmatmul.mubr.bf16.gmra.mrb[0].mxu0 %v972
        %v1757 = vpop.f32.mrb[0].mxu0
        %v1758 = vadd.f32 %v1661, %v1757
        %v1759 = vpop.f32.mrb[0].mxu0
        %v1760 = vpop.f32.mrb[0].mxu0
        %v1761 = vadd.f32 %v1664, %v1760
        %v1762 = vpop.f32.mrb[0].mxu0
        %1763 = vmatprep.mubr.bf16.mxu0 0
        %1764 = vmatmul.mubr.bf16.gmra.mrb[0].mxu0 %v975
        %v1765 = vpop.f32.mrb[0].mxu0
        %v1766 = vadd.f32 %v1669, %v1765
        %v1767 = vpop.f32.mrb[0].mxu0
        %v1768 = vpop.f32.mrb[0].mxu0
        %v1769 = vadd.f32 %v1672, %v1768
        %v1770 = vpop.f32.mrb[0].mxu0
        %1771 = vmatprep.mubr.bf16.mxu0 0
        %1772 = vmatmul.mubr.bf16.gmra.mrb[0].mxu0 %v978
        %v1773 = vpop.f32.mrb[0].mxu0
        %v1774 = vadd.f32 %v1677, %v1773
        %v1775 = vpop.f32.mrb[0].mxu0
        %v1776 = vpop.f32.mrb[0].mxu0
        %v1777 = vadd.f32 %v1680, %v1776
        %v1778 = vpop.f32.mrb[0].mxu0
        %1779 = vdwg.mxu0
        %s1780 = sadd.s32 %s276, 2
        %s1781 = smul.u32 %s1780, 3
        %s1782 = smul.addr %s1781, 8
        %s1783 = scalar_lea.vmem [#allocation2], %s1782
        %v1784 = vld [vmem:[%s1783] sm:$0xff]
        %v1785 = vld [vmem:[%s1783 + $0x8] sm:$0xff]
        %v1786 = vld [vmem:[%s1783 + $0x10] sm:$0xff]
        %v1787 = vld [vmem:[%s1783 + $0x18] sm:$0xff]
        %v1788 = vld [vmem:[%s1783 + $0x20] sm:$0xff]
        %v1789 = vld [vmem:[%s1783 + $0x28] sm:$0xff]
        %v1790 = vld [vmem:[%s1783 + $0x30] sm:$0xff]
        %v1791 = vld [vmem:[%s1783 + $0x38] sm:$0xff]
        %v1792 = vld [vmem:[%s1783 + $0x40] sm:$0xff]
        %v1793 = vld [vmem:[%s1783 + $0x48] sm:$0xff]
        %v1794 = vld [vmem:[%s1783 + $0x50] sm:$0xff]
        %v1795 = vld [vmem:[%s1783 + $0x58] sm:$0xff]
        %v1796 = vld [vmem:[%s1783 + $0x60] sm:$0xff]
        %v1797 = vld [vmem:[%s1783 + $0x68] sm:$0xff]
        %v1798 = vld [vmem:[%s1783 + $0x70] sm:$0xff]
        %v1799 = vld [vmem:[%s1783 + $0x78] sm:$0xff]
        %v1800 = vld [vmem:[%s1783 + $0x80] sm:$0xff]
        %v1801 = vld [vmem:[%s1783 + $0x88] sm:$0xff]
        %v1802 = vld [vmem:[%s1783 + $0x90] sm:$0xff]
        %v1803 = vld [vmem:[%s1783 + $0x98] sm:$0xff]
        %v1804 = vld [vmem:[%s1783 + $0xa0] sm:$0xff]
        %v1805 = vld [vmem:[%s1783 + $0xa8] sm:$0xff]
        %v1806 = vld [vmem:[%s1783 + $0xb0] sm:$0xff]
        %v1807 = vld [vmem:[%s1783 + $0xb8] sm:$0xff]
        %s1808 = scalar_lea.vmem [#allocation8], 384
        %v1809 = vld [vmem:[%s1808] sm:$0xf]
        %v1810 = vld [vmem:[%s1808 + $0x4] sm:$0xf]
        %v1811 = vld [vmem:[%s1808 + $0x8] sm:$0xf]
        %v1812 = vld [vmem:[%s1808 + $0xc] sm:$0xf]
        %v1813 = vld [vmem:[%s1808 + $0x10] sm:$0xf]
        %v1814 = vld [vmem:[%s1808 + $0x14] sm:$0xf]
        %v1815 = vld [vmem:[%s1808 + $0x18] sm:$0xf]
        %v1816 = vld [vmem:[%s1808 + $0x1c] sm:$0xf]
        %v1817 = vld [vmem:[%s1808 + $0x20] sm:$0xf]
        %v1818 = vld [vmem:[%s1808 + $0x24] sm:$0xf]
        %v1819 = vld [vmem:[%s1808 + $0x28] sm:$0xf]
        %v1820 = vld [vmem:[%s1808 + $0x2c] sm:$0xf]
        %v1821 = vld [vmem:[%s1808 + $0x30] sm:$0xf]
        %v1822 = vld [vmem:[%s1808 + $0x34] sm:$0xf]
        %v1823 = vld [vmem:[%s1808 + $0x38] sm:$0xf]
        %v1824 = vld [vmem:[%s1808 + $0x3c] sm:$0xf]
        %v1825 = vld [vmem:[%s1808 + $0x40] sm:$0xf]
        %v1826 = vld [vmem:[%s1808 + $0x44] sm:$0xf]
        %v1827 = vld [vmem:[%s1808 + $0x48] sm:$0xf]
        %v1828 = vld [vmem:[%s1808 + $0x4c] sm:$0xf]
        %v1829 = vld [vmem:[%s1808 + $0x50] sm:$0xf]
        %v1830 = vld [vmem:[%s1808 + $0x54] sm:$0xf]
        %v1831 = vld [vmem:[%s1808 + $0x58] sm:$0xf]
        %v1832 = vld [vmem:[%s1808 + $0x5c] sm:$0xf]
        %v1833 = vld [vmem:[%s1808 + $0x60] sm:$0xf]
        %v1834 = vld [vmem:[%s1808 + $0x64] sm:$0xf]
        %v1835 = vld [vmem:[%s1808 + $0x68] sm:$0xf]
        %v1836 = vld [vmem:[%s1808 + $0x6c] sm:$0xf]
        %v1837 = vld [vmem:[%s1808 + $0x70] sm:$0xf]
        %v1838 = vld [vmem:[%s1808 + $0x74] sm:$0xf]
        %v1839 = vld [vmem:[%s1808 + $0x78] sm:$0xf]
        %v1840 = vld [vmem:[%s1808 + $0x7c] sm:$0xf]
        %v1841 = vld [vmem:[%s1808 + $0x80] sm:$0xf]
        %v1842 = vld [vmem:[%s1808 + $0x84] sm:$0xf]
        %v1843 = vld [vmem:[%s1808 + $0x88] sm:$0xf]
        %v1844 = vld [vmem:[%s1808 + $0x8c] sm:$0xf]
        %v1845 = vld [vmem:[%s1808 + $0x90] sm:$0xf]
        %v1846 = vld [vmem:[%s1808 + $0x94] sm:$0xf]
        %v1847 = vld [vmem:[%s1808 + $0x98] sm:$0xf]
        %v1848 = vld [vmem:[%s1808 + $0x9c] sm:$0xf]
        %v1849 = vld [vmem:[%s1808 + $0xa0] sm:$0xf]
        %v1850 = vld [vmem:[%s1808 + $0xa4] sm:$0xf]
        %v1851 = vld [vmem:[%s1808 + $0xa8] sm:$0xf]
        %v1852 = vld [vmem:[%s1808 + $0xac] sm:$0xf]
        %v1853 = vld [vmem:[%s1808 + $0xb0] sm:$0xf]
        %v1854 = vld [vmem:[%s1808 + $0xb4] sm:$0xf]
        %v1855 = vld [vmem:[%s1808 + $0xb8] sm:$0xf]
        %v1856 = vld [vmem:[%s1808 + $0xbc] sm:$0xf]
        %v1905 = vunpack.c.l.b16 %v1809
        %v1906 = vunpack.c.l.b16 %v1810
        %v1907 = vunpack.c.l.b16 %v1811
        %v1908 = vunpack.c.l.b16 %v1812
        %v1909 = vunpack.c.l.b16 %v1813
        %v1910 = vunpack.c.l.b16 %v1814
        %v1911 = vunpack.c.l.b16 %v1815
        %v1912 = vunpack.c.l.b16 %v1816
        %v1913 = vunpack.c.l.b16 %v1817
        %v1914 = vunpack.c.l.b16 %v1818
        %v1915 = vunpack.c.l.b16 %v1819
        %v1916 = vunpack.c.l.b16 %v1820
        %v1917 = vunpack.c.l.b16 %v1821
        %v1918 = vunpack.c.l.b16 %v1822
        %v1919 = vunpack.c.l.b16 %v1823
        %v1920 = vunpack.c.l.b16 %v1824
        %v1921 = vunpack.c.l.b16 %v1825
        %v1922 = vunpack.c.l.b16 %v1826
        %v1923 = vunpack.c.l.b16 %v1827
        %v1924 = vunpack.c.l.b16 %v1828
        %v1925 = vunpack.c.l.b16 %v1829
        %v1926 = vunpack.c.l.b16 %v1830
        %v1927 = vunpack.c.l.b16 %v1831
        %v1928 = vunpack.c.l.b16 %v1832
        %v1929 = vunpack.c.l.b16 %v1833
        %v1930 = vunpack.c.l.b16 %v1834
        %v1931 = vunpack.c.l.b16 %v1835
        %v1932 = vunpack.c.l.b16 %v1836
        %v1933 = vunpack.c.l.b16 %v1837
        %v1934 = vunpack.c.l.b16 %v1838
        %v1935 = vunpack.c.l.b16 %v1839
        %v1936 = vunpack.c.l.b16 %v1840
        %v1937 = vunpack.c.l.b16 %v1841
        %v1938 = vunpack.c.l.b16 %v1842
        %v1939 = vunpack.c.l.b16 %v1843
        %v1940 = vunpack.c.l.b16 %v1844
        %v1941 = vunpack.c.l.b16 %v1845
        %v1942 = vunpack.c.l.b16 %v1846
        %v1943 = vunpack.c.l.b16 %v1847
        %v1944 = vunpack.c.l.b16 %v1848
        %v1945 = vunpack.c.l.b16 %v1849
        %v1946 = vunpack.c.l.b16 %v1850
        %v1947 = vunpack.c.l.b16 %v1851
        %v1948 = vunpack.c.l.b16 %v1852
        %v1949 = vunpack.c.l.b16 %v1853
        %v1950 = vunpack.c.l.b16 %v1854
        %v1951 = vunpack.c.l.b16 %v1855
        %v1952 = vunpack.c.l.b16 %v1856
        %v1953 = vpack.c.b16 %v1906, %v1905
        %v1954 = vpack.c.b16 %v1908, %v1907
        %v1955 = vpack.c.b16 %v1910, %v1909
        %v1956 = vpack.c.b16 %v1912, %v1911
        %v1957 = vpack.c.b16 %v1914, %v1913
        %v1958 = vpack.c.b16 %v1916, %v1915
        %v1959 = vpack.c.b16 %v1918, %v1917
        %v1960 = vpack.c.b16 %v1920, %v1919
        %v1961 = vpack.c.b16 %v1922, %v1921
        %v1962 = vpack.c.b16 %v1924, %v1923
        %v1963 = vpack.c.b16 %v1926, %v1925
        %v1964 = vpack.c.b16 %v1928, %v1927
        %v1965 = vpack.c.b16 %v1930, %v1929
        %v1966 = vpack.c.b16 %v1932, %v1931
        %v1967 = vpack.c.b16 %v1934, %v1933
        %v1968 = vpack.c.b16 %v1936, %v1935
        %v1969 = vpack.c.b16 %v1938, %v1937
        %v1970 = vpack.c.b16 %v1940, %v1939
        %v1971 = vpack.c.b16 %v1942, %v1941
        %v1972 = vpack.c.b16 %v1944, %v1943
        %v1973 = vpack.c.b16 %v1946, %v1945
        %v1974 = vpack.c.b16 %v1948, %v1947
        %v1975 = vpack.c.b16 %v1950, %v1949
        %v1976 = vpack.c.b16 %v1952, %v1951
        %2001 = vmatprep.subr.bf16.mxu0 0
        %2002 = vmatpush1.bf16.msra.mxu0 %v1953
        %2003 = vmatprep.subr.bf16.mxu0 0
        %2004 = vmatpush1.bf16.msra.mxu0 %v1954
        %2005 = vmatprep.subr.bf16.mxu0 0
        %2006 = vmatpush1.bf16.msra.mxu0 %v1955
        %2007 = vmatprep.subr.bf16.mxu0 0
        %2008 = vmatpush1.bf16.msra.mxu0 %v1956
        %2009 = vmatprep.subr.bf16.mxu0 0
        %2010 = vmatpush1.bf16.msra.mxu0 %v1957
        %2011 = vmatprep.subr.bf16.mxu0 0
        %2012 = vmatpush1.bf16.msra.mxu0 %v1958
        %2013 = vmatprep.subr.bf16.mxu0 0
        %2014 = vmatpush1.bf16.msra.mxu0 %v1959
        %2015 = vmatprep.subr.bf16.mxu0 0
        %2016 = vmatpush1.bf16.msra.mxu0 %v1960
        %2017 = vmatprep.subr.bf16.mxu0 0
        %2018 = vmatpush1.bf16.msra.mxu0 %v1961
        %2019 = vmatprep.subr.bf16.mxu0 0
        %2020 = vmatpush1.bf16.msra.mxu0 %v1962
        %2021 = vmatprep.subr.bf16.mxu0 0
        %2022 = vmatpush1.bf16.msra.mxu0 %v1963
        %2023 = vmatprep.subr.bf16.mxu0 0
        %2024 = vmatpush1.bf16.msra.mxu0 %v1964
        %2025 = vmatprep.subr.bf16.mxu0 0
        %2026 = vmatpush1.bf16.msra.mxu0 %v1965
        %2027 = vmatprep.subr.bf16.mxu0 0
        %2028 = vmatpush1.bf16.msra.mxu0 %v1966
        %2029 = vmatprep.subr.bf16.mxu0 0
        %2030 = vmatpush1.bf16.msra.mxu0 %v1967
        %2031 = vmatprep.subr.bf16.mxu0 0
        %2032 = vmatpush1.bf16.msra.mxu0 %v1968
        %2033 = vmatprep.mubr.bf16.mxu0 %v1785
        %2034 = vmatmul.mubr.bf16.gmra.mrb[0].mxu0 %v1784
        %v2035 = vpop.f32.mrb[0].mxu0
        %v2036 = vadd.f32 0.0, %v2035
        %v2037 = vpop.f32.mrb[0].mxu0
        %v2038 = vpop.f32.mrb[0].mxu0
        %v2039 = vadd.f32 0.0, %v2038
        %v2040 = vpop.f32.mrb[0].mxu0
        %2041 = vmatprep.mubr.bf16.mxu0 %v1788
        %2042 = vmatmul.mubr.bf16.gmra.mrb[0].mxu0 %v1787
        %v2043 = vpop.f32.mrb[0].mxu0
        %v2044 = vadd.f32 0.0, %v2043
        %v2045 = vpop.f32.mrb[0].mxu0
        %v2046 = vpop.f32.mrb[0].mxu0
        %v2047 = vadd.f32 0.0, %v2046
        %v2048 = vpop.f32.mrb[0].mxu0
        %2049 = vmatprep.mubr.bf16.mxu0 %v1791
        %2050 = vmatmul.mubr.bf16.gmra.mrb[0].mxu0 %v1790
        %v2051 = vpop.f32.mrb[0].mxu0
        %v2052 = vadd.f32 0.0, %v2051
        %v2053 = vpop.f32.mrb[0].mxu0
        %v2054 = vpop.f32.mrb[0].mxu0
        %v2055 = vadd.f32 0.0, %v2054
        %v2056 = vpop.f32.mrb[0].mxu0
        %2057 = vmatprep.mubr.bf16.mxu0 %v1794
        %2058 = vmatmul.mubr.bf16.gmra.mrb[0].mxu0 %v1793
        %v2059 = vpop.f32.mrb[0].mxu0
        %v2060 = vadd.f32 0.0, %v2059
        %v2061 = vpop.f32.mrb[0].mxu0
        %v2062 = vpop.f32.mrb[0].mxu0
        %v2063 = vadd.f32 0.0, %v2062
        %v2064 = vpop.f32.mrb[0].mxu0
        %2065 = vmatprep.mubr.bf16.mxu0 %v1797
        %2066 = vmatmul.mubr.bf16.gmra.mrb[0].mxu0 %v1796
        %v2067 = vpop.f32.mrb[0].mxu0
        %v2068 = vadd.f32 0.0, %v2067
        %v2069 = vpop.f32.mrb[0].mxu0
        %v2070 = vpop.f32.mrb[0].mxu0
        %v2071 = vadd.f32 0.0, %v2070
        %v2072 = vpop.f32.mrb[0].mxu0
        %2073 = vmatprep.mubr.bf16.mxu0 %v1800
        %2074 = vmatmul.mubr.bf16.gmra.mrb[0].mxu0 %v1799
        %v2075 = vpop.f32.mrb[0].mxu0
        %v2076 = vadd.f32 0.0, %v2075
        %v2077 = vpop.f32.mrb[0].mxu0
        %v2078 = vpop.f32.mrb[0].mxu0
        %v2079 = vadd.f32 0.0, %v2078
        %v2080 = vpop.f32.mrb[0].mxu0
        %2081 = vmatprep.mubr.bf16.mxu0 %v1803
        %2082 = vmatmul.mubr.bf16.gmra.mrb[0].mxu0 %v1802
        %v2083 = vpop.f32.mrb[0].mxu0
        %v2084 = vadd.f32 0.0, %v2083
        %v2085 = vpop.f32.mrb[0].mxu0
        %v2086 = vpop.f32.mrb[0].mxu0
        %v2087 = vadd.f32 0.0, %v2086
        %v2088 = vpop.f32.mrb[0].mxu0
        %2089 = vmatprep.mubr.bf16.mxu0 %v1806
        %2090 = vmatmul.mubr.bf16.gmra.mrb[0].mxu0 %v1805
        %v2091 = vpop.f32.mrb[0].mxu0
        %v2092 = vadd.f32 0.0, %v2091
        %v2093 = vpop.f32.mrb[0].mxu0
        %v2094 = vpop.f32.mrb[0].mxu0
        %v2095 = vadd.f32 0.0, %v2094
        %v2096 = vpop.f32.mrb[0].mxu0
        %2097 = vdwg.mxu0
        %2098 = vmatprep.subr.bf16.mxu0 0
        %2099 = vmatpush1.bf16.msra.mxu0 %v1969
        %2100 = vmatprep.subr.bf16.mxu0 0
        %2101 = vmatpush1.bf16.msra.mxu0 %v1970
        %2102 = vmatprep.subr.bf16.mxu0 0
        %2103 = vmatpush1.bf16.msra.mxu0 %v1971
        %2104 = vmatprep.subr.bf16.mxu0 0
        %2105 = vmatpush1.bf16.msra.mxu0 %v1972
        %2106 = vmatprep.subr.bf16.mxu0 0
        %2107 = vmatpush1.bf16.msra.mxu0 %v1973
        %2108 = vmatprep.subr.bf16.mxu0 0
        %2109 = vmatpush1.bf16.msra.mxu0 %v1974
        %2110 = vmatprep.subr.bf16.mxu0 0
        %2111 = vmatpush1.bf16.msra.mxu0 %v1975
        %2112 = vmatprep.subr.bf16.mxu0 0
        %2113 = vmatpush1.bf16.msra.mxu0 %v1976
        %2114 = vmatprep.subr.bf16.mxu0 0
        %2115 = vmatpush1.bf16.msra.mxu0 0
        %2116 = vmatprep.subr.bf16.mxu0 0
        %2117 = vmatpush1.bf16.msra.mxu0 0
        %2118 = vmatprep.subr.bf16.mxu0 0
        %2119 = vmatpush1.bf16.msra.mxu0 0
        %2120 = vmatprep.subr.bf16.mxu0 0
        %2121 = vmatpush1.bf16.msra.mxu0 0
        %2122 = vmatprep.subr.bf16.mxu0 0
        %2123 = vmatpush1.bf16.msra.mxu0 0
        %2124 = vmatprep.subr.bf16.mxu0 0
        %2125 = vmatpush1.bf16.msra.mxu0 0
        %2126 = vmatprep.subr.bf16.mxu0 0
        %2127 = vmatpush1.bf16.msra.mxu0 0
        %2128 = vmatprep.subr.bf16.mxu0 0
        %2129 = vmatpush1.bf16.msra.mxu0 0
        %2130 = vmatprep.mubr.bf16.mxu0 0
        %2131 = vmatmul.mubr.bf16.gmra.mrb[0].mxu0 %v1786
        %v2132 = vpop.f32.mrb[0].mxu0
        %v2133 = vadd.f32 %v2036, %v2132
        %v2134 = vpop.f32.mrb[0].mxu0
        %v2135 = vpop.f32.mrb[0].mxu0
        %v2136 = vadd.f32 %v2039, %v2135
        %v2137 = vpop.f32.mrb[0].mxu0
        %2138 = vmatprep.mubr.bf16.mxu0 0
        %2139 = vmatmul.mubr.bf16.gmra.mrb[0].mxu0 %v1789
        %v2140 = vpop.f32.mrb[0].mxu0
        %v2141 = vadd.f32 %v2044, %v2140
        %v2142 = vpop.f32.mrb[0].mxu0
        %v2143 = vpop.f32.mrb[0].mxu0
        %v2144 = vadd.f32 %v2047, %v2143
        %v2145 = vpop.f32.mrb[0].mxu0
        %2146 = vmatprep.mubr.bf16.mxu0 0
        %2147 = vmatmul.mubr.bf16.gmra.mrb[0].mxu0 %v1792
        %v2148 = vpop.f32.mrb[0].mxu0
        %v2149 = vadd.f32 %v2052, %v2148
        %v2150 = vpop.f32.mrb[0].mxu0
        %v2151 = vpop.f32.mrb[0].mxu0
        %v2152 = vadd.f32 %v2055, %v2151
        %v2153 = vpop.f32.mrb[0].mxu0
        %2154 = vmatprep.mubr.bf16.mxu0 0
        %2155 = vmatmul.mubr.bf16.gmra.mrb[0].mxu0 %v1795
        %v2156 = vpop.f32.mrb[0].mxu0
        %v2157 = vadd.f32 %v2060, %v2156
        %v2158 = vpop.f32.mrb[0].mxu0
        %v2159 = vpop.f32.mrb[0].mxu0
        %v2160 = vadd.f32 %v2063, %v2159
        %v2161 = vpop.f32.mrb[0].mxu0
        %2162 = vmatprep.mubr.bf16.mxu0 0
        %2163 = vmatmul.mubr.bf16.gmra.mrb[0].mxu0 %v1798
        %v2164 = vpop.f32.mrb[0].mxu0
        %v2165 = vadd.f32 %v2068, %v2164
        %v2166 = vpop.f32.mrb[0].mxu0
        %v2167 = vpop.f32.mrb[0].mxu0
        %v2168 = vadd.f32 %v2071, %v2167
        %v2169 = vpop.f32.mrb[0].mxu0
        %2170 = vmatprep.mubr.bf16.mxu0 0
        %2171 = vmatmul.mubr.bf16.gmra.mrb[0].mxu0 %v1801
        %v2172 = vpop.f32.mrb[0].mxu0
        %v2173 = vadd.f32 %v2076, %v2172
        %v2174 = vpop.f32.mrb[0].mxu0
        %v2175 = vpop.f32.mrb[0].mxu0
        %v2176 = vadd.f32 %v2079, %v2175
        %v2177 = vpop.f32.mrb[0].mxu0
        %2178 = vmatprep.mubr.bf16.mxu0 0
        %2179 = vmatmul.mubr.bf16.gmra.mrb[0].mxu0 %v1804
        %v2180 = vpop.f32.mrb[0].mxu0
        %v2181 = vadd.f32 %v2084, %v2180
        %v2182 = vpop.f32.mrb[0].mxu0
        %v2183 = vpop.f32.mrb[0].mxu0
        %v2184 = vadd.f32 %v2087, %v2183
        %v2185 = vpop.f32.mrb[0].mxu0
        %2186 = vmatprep.mubr.bf16.mxu0 0
        %2187 = vmatmul.mubr.bf16.gmra.mrb[0].mxu0 %v1807
        %v2188 = vpop.f32.mrb[0].mxu0
        %v2189 = vadd.f32 %v2092, %v2188
        %v2190 = vpop.f32.mrb[0].mxu0
        %v2191 = vpop.f32.mrb[0].mxu0
        %v2192 = vadd.f32 %v2095, %v2191
        %v2193 = vpop.f32.mrb[0].mxu0
        %2194 = vdwg.mxu0
        %v2195 = vadd.f32 %v1718, %v2133
        %v2196 = vadd.f32 %v1721, %v2136
        %v2197 = vadd.f32 %v1726, %v2141
        %v2198 = vadd.f32 %v1729, %v2144
        %v2199 = vadd.f32 %v1734, %v2149
        %v2200 = vadd.f32 %v1737, %v2152
        %v2201 = vadd.f32 %v1742, %v2157
        %v2202 = vadd.f32 %v1745, %v2160
        %v2203 = vadd.f32 %v1750, %v2165
        %v2204 = vadd.f32 %v1753, %v2168
        %v2205 = vadd.f32 %v1758, %v2173
        %v2206 = vadd.f32 %v1761, %v2176
        %v2207 = vadd.f32 %v1766, %v2181
        %v2208 = vadd.f32 %v1769, %v2184
        %v2209 = vadd.f32 %v1774, %v2189
        %v2210 = vadd.f32 %v1777, %v2192
        %v2211 = vmax.f32 %v2195, 0.0
        %v2212 = vmax.f32 %v2196, 0.0
        %v2213 = vmax.f32 %v2197, 0.0
        %v2214 = vmax.f32 %v2198, 0.0
        %v2215 = vmax.f32 %v2199, 0.0
        %v2216 = vmax.f32 %v2200, 0.0
        %v2217 = vmax.f32 %v2201, 0.0
        %v2218 = vmax.f32 %v2202, 0.0
        %v2219 = vmax.f32 %v2203, 0.0
        %v2220 = vmax.f32 %v2204, 0.0
        %v2221 = vmax.f32 %v2205, 0.0
        %v2222 = vmax.f32 %v2206, 0.0
        %v2223 = vmax.f32 %v2207, 0.0
        %v2224 = vmax.f32 %v2208, 0.0
        %v2225 = vmax.f32 %v2209, 0.0
        %v2226 = vmax.f32 %v2210, 0.0
        %v2227 = vpack.c.bf16 %v2212, %v2211
        %v2228 = vpack.c.bf16 %v2214, %v2213
        %v2229 = vpack.c.bf16 %v2216, %v2215
        %v2230 = vpack.c.bf16 %v2218, %v2217
        %v2231 = vpack.c.bf16 %v2220, %v2219
        %v2232 = vpack.c.bf16 %v2222, %v2221
        %v2233 = vpack.c.bf16 %v2224, %v2223
        %v2234 = vpack.c.bf16 %v2226, %v2225
        %v2235 = vld [vmem:[#allocation9] sm:$0xf]
        %v2236 = vld [vmem:[#allocation9 + $0x4] sm:$0xf]
        %v2237 = vld [vmem:[#allocation9 + $0x8] sm:$0xf]
        %v2238 = vld [vmem:[#allocation9 + $0xc] sm:$0xf]
        %v2239 = vld [vmem:[#allocation9 + $0x10] sm:$0xf]
        %v2240 = vld [vmem:[#allocation9 + $0x14] sm:$0xf]
        %v2241 = vld [vmem:[#allocation9 + $0x18] sm:$0xf]
        %v2242 = vld [vmem:[#allocation9 + $0x1c] sm:$0xf]
        %v2243 = vld [vmem:[#allocation9 + $0x20] sm:$0xf]
        %v2244 = vld [vmem:[#allocation9 + $0x24] sm:$0xf]
        %v2245 = vld [vmem:[#allocation9 + $0x28] sm:$0xf]
        %v2246 = vld [vmem:[#allocation9 + $0x2c] sm:$0xf]
        %v2247 = vld [vmem:[#allocation9 + $0x30] sm:$0xf]
        %v2248 = vld [vmem:[#allocation9 + $0x34] sm:$0xf]
        %v2249 = vld [vmem:[#allocation9 + $0x38] sm:$0xf]
        %v2250 = vld [vmem:[#allocation9 + $0x3c] sm:$0xf]
        %s2251 = smul.u32 %s276, 2
        %s2252 = smul.addr %s2251, 4
        %s2253 = scalar_lea.vmem %s237, %s2252 [#allocation3]
        %v2254 = vld [vmem:[%s2253] sm:$0xf]
        %v2255 = vld [vmem:[%s2253 + $0x4] sm:$0xf]
        %v2256 = vld [vmem:[%s2253 + $0x8] sm:$0xf]
        %v2257 = vld [vmem:[%s2253 + $0xc] sm:$0xf]
        %v2258 = vld [vmem:[%s2253 + $0x10] sm:$0xf]
        %v2259 = vld [vmem:[%s2253 + $0x14] sm:$0xf]
        %v2260 = vld [vmem:[%s2253 + $0x18] sm:$0xf]
        %v2261 = vld [vmem:[%s2253 + $0x1c] sm:$0xf]
        %v2262 = vld [vmem:[%s2253 + $0x20] sm:$0xf]
        %v2263 = vld [vmem:[%s2253 + $0x24] sm:$0xf]
        %v2264 = vld [vmem:[%s2253 + $0x28] sm:$0xf]
        %v2265 = vld [vmem:[%s2253 + $0x2c] sm:$0xf]
        %v2266 = vld [vmem:[%s2253 + $0x30] sm:$0xf]
        %v2267 = vld [vmem:[%s2253 + $0x34] sm:$0xf]
        %v2268 = vld [vmem:[%s2253 + $0x38] sm:$0xf]
        %v2269 = vld [vmem:[%s2253 + $0x3c] sm:$0xf]
        %v2270 = vunpack.c.l.bf16 %v2254
        %v2271 = vunpack.c.l.bf16 %v2255
        %v2272 = vunpack.c.l.bf16 %v2256
        %v2273 = vunpack.c.l.bf16 %v2257
        %v2274 = vunpack.c.l.bf16 %v2258
        %v2275 = vunpack.c.l.bf16 %v2259
        %v2276 = vunpack.c.l.bf16 %v2260
        %v2277 = vunpack.c.l.bf16 %v2261
        %v2278 = vunpack.c.l.bf16 %v2262
        %v2279 = vunpack.c.l.bf16 %v2263
        %v2280 = vunpack.c.l.bf16 %v2264
        %v2281 = vunpack.c.l.bf16 %v2265
        %v2282 = vunpack.c.l.bf16 %v2266
        %v2283 = vunpack.c.l.bf16 %v2267
        %v2284 = vunpack.c.l.bf16 %v2268
        %v2285 = vunpack.c.l.bf16 %v2269
        %v2302 = vunpack.c.l.b16 %v2235
        %v2303 = vunpack.c.l.b16 %v2236
        %v2304 = vunpack.c.l.b16 %v2237
        %v2305 = vunpack.c.l.b16 %v2238
        %v2306 = vunpack.c.l.b16 %v2239
        %v2307 = vunpack.c.l.b16 %v2240
        %v2308 = vunpack.c.l.b16 %v2241
        %v2309 = vunpack.c.l.b16 %v2242
        %v2310 = vunpack.c.l.b16 %v2243
        %v2311 = vunpack.c.l.b16 %v2244
        %v2312 = vunpack.c.l.b16 %v2245
        %v2313 = vunpack.c.l.b16 %v2246
        %v2314 = vunpack.c.l.b16 %v2247
        %v2315 = vunpack.c.l.b16 %v2248
        %v2316 = vunpack.c.l.b16 %v2249
        %v2317 = vunpack.c.l.b16 %v2250
        %v2318 = vpack.c.b16 %v2303, %v2302
        %v2319 = vpack.c.b16 %v2305, %v2304
        %v2320 = vpack.c.b16 %v2307, %v2306
        %v2321 = vpack.c.b16 %v2309, %v2308
        %v2322 = vpack.c.b16 %v2311, %v2310
        %v2323 = vpack.c.b16 %v2313, %v2312
        %v2324 = vpack.c.b16 %v2315, %v2314
        %v2325 = vpack.c.b16 %v2317, %v2316
        %2334 = vmatprep.subr.bf16.mxu0 0
        %2335 = vmatpush1.bf16.msra.mxu0 %v2318
        %2336 = vmatprep.subr.bf16.mxu0 0
        %2337 = vmatpush1.bf16.msra.mxu0 %v2319
        %2338 = vmatprep.subr.bf16.mxu0 0
        %2339 = vmatpush1.bf16.msra.mxu0 %v2320
        %2340 = vmatprep.subr.bf16.mxu0 0
        %2341 = vmatpush1.bf16.msra.mxu0 %v2321
        %2342 = vmatprep.subr.bf16.mxu0 0
        %2343 = vmatpush1.bf16.msra.mxu0 %v2322
        %2344 = vmatprep.subr.bf16.mxu0 0
        %2345 = vmatpush1.bf16.msra.mxu0 %v2323
        %2346 = vmatprep.subr.bf16.mxu0 0
        %2347 = vmatpush1.bf16.msra.mxu0 %v2324
        %2348 = vmatprep.subr.bf16.mxu0 0
        %2349 = vmatpush1.bf16.msra.mxu0 %v2325
        %2350 = vmatprep.subr.bf16.mxu0 0
        %2351 = vmatpush1.bf16.msra.mxu0 0
        %2352 = vmatprep.subr.bf16.mxu0 0
        %2353 = vmatpush1.bf16.msra.mxu0 0
        %2354 = vmatprep.subr.bf16.mxu0 0
        %2355 = vmatpush1.bf16.msra.mxu0 0
        %2356 = vmatprep.subr.bf16.mxu0 0
        %2357 = vmatpush1.bf16.msra.mxu0 0
        %2358 = vmatprep.subr.bf16.mxu0 0
        %2359 = vmatpush1.bf16.msra.mxu0 0
        %2360 = vmatprep.subr.bf16.mxu0 0
        %2361 = vmatpush1.bf16.msra.mxu0 0
        %2362 = vmatprep.subr.bf16.mxu0 0
        %2363 = vmatpush1.bf16.msra.mxu0 0
        %2364 = vmatprep.subr.bf16.mxu0 0
        %2365 = vmatpush1.bf16.msra.mxu0 0
        %2366 = vmatprep.mubr.bf16.mxu0 0
        %2367 = vmatmul.mubr.bf16.gmra.mrb[0].mxu0 %v2227
        %v2368 = vpop.f32.mrb[0].mxu0
        %v2369 = vadd.f32 %v2270, %v2368
        %v2370 = vpop.f32.mrb[0].mxu0
        %v2371 = vpop.f32.mrb[0].mxu0
        %v2372 = vadd.f32 %v2271, %v2371
        %v2373 = vpop.f32.mrb[0].mxu0
        %2374 = vmatprep.mubr.bf16.mxu0 0
        %2375 = vmatmul.mubr.bf16.gmra.mrb[0].mxu0 %v2228
        %v2376 = vpop.f32.mrb[0].mxu0
        %v2377 = vadd.f32 %v2272, %v2376
        %v2378 = vpop.f32.mrb[0].mxu0
        %v2379 = vpop.f32.mrb[0].mxu0
        %v2380 = vadd.f32 %v2273, %v2379
        %v2381 = vpop.f32.mrb[0].mxu0
        %2382 = vmatprep.mubr.bf16.mxu0 0
        %2383 = vmatmul.mubr.bf16.gmra.mrb[0].mxu0 %v2229
        %v2384 = vpop.f32.mrb[0].mxu0
        %v2385 = vadd.f32 %v2274, %v2384
        %v2386 = vpop.f32.mrb[0].mxu0
        %v2387 = vpop.f32.mrb[0].mxu0
        %v2388 = vadd.f32 %v2275, %v2387
        %v2389 = vpop.f32.mrb[0].mxu0
        %2390 = vmatprep.mubr.bf16.mxu0 0
        %2391 = vmatmul.mubr.bf16.gmra.mrb[0].mxu0 %v2230
        %v2392 = vpop.f32.mrb[0].mxu0
        %v2393 = vadd.f32 %v2276, %v2392
        %v2394 = vpop.f32.mrb[0].mxu0
        %v2395 = vpop.f32.mrb[0].mxu0
        %v2396 = vadd.f32 %v2277, %v2395
        %v2397 = vpop.f32.mrb[0].mxu0
        %2398 = vmatprep.mubr.bf16.mxu0 0
        %2399 = vmatmul.mubr.bf16.gmra.mrb[0].mxu0 %v2231
        %v2400 = vpop.f32.mrb[0].mxu0
        %v2401 = vadd.f32 %v2278, %v2400
        %v2402 = vpop.f32.mrb[0].mxu0
        %v2403 = vpop.f32.mrb[0].mxu0
        %v2404 = vadd.f32 %v2279, %v2403
        %v2405 = vpop.f32.mrb[0].mxu0
        %2406 = vmatprep.mubr.bf16.mxu0 0
        %2407 = vmatmul.mubr.bf16.gmra.mrb[0].mxu0 %v2232
        %v2408 = vpop.f32.mrb[0].mxu0
        %v2409 = vadd.f32 %v2280, %v2408
        %v2410 = vpop.f32.mrb[0].mxu0
        %v2411 = vpop.f32.mrb[0].mxu0
        %v2412 = vadd.f32 %v2281, %v2411
        %v2413 = vpop.f32.mrb[0].mxu0
        %2414 = vmatprep.mubr.bf16.mxu0 0
        %2415 = vmatmul.mubr.bf16.gmra.mrb[0].mxu0 %v2233
        %v2416 = vpop.f32.mrb[0].mxu0
        %v2417 = vadd.f32 %v2282, %v2416
        %v2418 = vpop.f32.mrb[0].mxu0
        %v2419 = vpop.f32.mrb[0].mxu0
        %v2420 = vadd.f32 %v2283, %v2419
        %v2421 = vpop.f32.mrb[0].mxu0
        %2422 = vmatprep.mubr.bf16.mxu0 0
        %2423 = vmatmul.mubr.bf16.gmra.mrb[0].mxu0 %v2234
        %v2424 = vpop.f32.mrb[0].mxu0
        %v2425 = vadd.f32 %v2284, %v2424
        %v2426 = vpop.f32.mrb[0].mxu0
        %v2427 = vpop.f32.mrb[0].mxu0
        %v2428 = vadd.f32 %v2285, %v2427
        %v2429 = vpop.f32.mrb[0].mxu0
        %2430 = vdwg.mxu0
        %v2431 = vmax.f32 %v2369, 0.0
        %v2432 = vmax.f32 %v2372, 0.0
        %v2433 = vmax.f32 %v2377, 0.0
        %v2434 = vmax.f32 %v2380, 0.0
        %v2435 = vmax.f32 %v2385, 0.0
        %v2436 = vmax.f32 %v2388, 0.0
        %v2437 = vmax.f32 %v2393, 0.0
        %v2438 = vmax.f32 %v2396, 0.0
        %v2439 = vmax.f32 %v2401, 0.0
        %v2440 = vmax.f32 %v2404, 0.0
        %v2441 = vmax.f32 %v2409, 0.0
        %v2442 = vmax.f32 %v2412, 0.0
        %v2443 = vmax.f32 %v2417, 0.0
        %v2444 = vmax.f32 %v2420, 0.0
        %v2445 = vmax.f32 %v2425, 0.0
        %v2446 = vmax.f32 %v2428, 0.0
        %v2447 = vpack.c.bf16 %v2432, %v2431
        %v2448 = vpack.c.bf16 %v2434, %v2433
        %v2449 = vpack.c.bf16 %v2436, %v2435
        %v2450 = vpack.c.bf16 %v2438, %v2437
        %v2451 = vpack.c.bf16 %v2440, %v2439
        %v2452 = vpack.c.bf16 %v2442, %v2441
        %v2453 = vpack.c.bf16 %v2444, %v2443
        %v2454 = vpack.c.bf16 %v2446, %v2445
        %v2463 = vunpack.c.l.b16 %v2447
        %v2464 = vunpack.c.h.b16 %v2447
        %v2465 = vunpack.c.l.b16 %v2448
        %v2466 = vunpack.c.h.b16 %v2448
        %v2467 = vunpack.c.l.b16 %v2449
        %v2468 = vunpack.c.h.b16 %v2449
        %v2469 = vunpack.c.l.b16 %v2450
        %v2470 = vunpack.c.h.b16 %v2450
        %v2471 = vunpack.c.l.b16 %v2451
        %v2472 = vunpack.c.h.b16 %v2451
        %v2473 = vunpack.c.l.b16 %v2452
        %v2474 = vunpack.c.h.b16 %v2452
        %v2475 = vunpack.c.l.b16 %v2453
        %v2476 = vunpack.c.h.b16 %v2453
        %v2477 = vunpack.c.l.b16 %v2454
        %v2478 = vunpack.c.h.b16 %v2454
        %v2479 = vpack.c.b16 %v2463, %v2463
        %v2480 = vpack.c.b16 %v2464, %v2464
        %v2481 = vpack.c.b16 %v2465, %v2465
        %v2482 = vpack.c.b16 %v2466, %v2466
        %v2483 = vpack.c.b16 %v2467, %v2467
        %v2484 = vpack.c.b16 %v2468, %v2468
        %v2485 = vpack.c.b16 %v2469, %v2469
        %v2486 = vpack.c.b16 %v2470, %v2470
        %v2487 = vpack.c.b16 %v2471, %v2471
        %v2488 = vpack.c.b16 %v2472, %v2472
        %v2489 = vpack.c.b16 %v2473, %v2473
        %v2490 = vpack.c.b16 %v2474, %v2474
        %v2491 = vpack.c.b16 %v2475, %v2475
        %v2492 = vpack.c.b16 %v2476, %v2476
        %v2493 = vpack.c.b16 %v2477, %v2477
        %v2494 = vpack.c.b16 %v2478, %v2478
        %2511 = vst [vmem:[%s273] sm:$0xf] %v2479
        %2512 = vst [vmem:[%s273 + $0x4] sm:$0xf] %v2480
        %2513 = vst [vmem:[%s273 + $0x8] sm:$0xf] %v2481
        %2514 = vst [vmem:[%s273 + $0xc] sm:$0xf] %v2482
        %2515 = vst [vmem:[%s273 + $0x10] sm:$0xf] %v2483
        %2516 = vst [vmem:[%s273 + $0x14] sm:$0xf] %v2484
        %2517 = vst [vmem:[%s273 + $0x18] sm:$0xf] %v2485
        %2518 = vst [vmem:[%s273 + $0x1c] sm:$0xf] %v2486
        %2519 = vst [vmem:[%s273 + $0x20] sm:$0xf] %v2487
        %2520 = vst [vmem:[%s273 + $0x24] sm:$0xf] %v2488
        %2521 = vst [vmem:[%s273 + $0x28] sm:$0xf] %v2489
        %2522 = vst [vmem:[%s273 + $0x2c] sm:$0xf] %v2490
        %2523 = vst [vmem:[%s273 + $0x30] sm:$0xf] %v2491
        %2524 = vst [vmem:[%s273 + $0x34] sm:$0xf] %v2492
        %2525 = vst [vmem:[%s273 + $0x38] sm:$0xf] %v2493
        %2526 = vst [vmem:[%s273 + $0x3c] sm:$0xf] %v2494
        %s2527 = sand.u32 %s134, 1
        %s2528 = scalar_lea.sflag [#allocation5], %s2527
        %s2529 = sand.u32 %s134, 1
        %s2530 = smul.addr %s2529, 64
        %s2531 = scalar_lea.vmem [#allocation11], %s2530
        // Predicated region
        $region57: #{tpu_custom_call.1} parent=35 // pred_check
          %p2532 = pneg %p144
        $region58: #{tpu_custom_call.1} parent=35 // pred_check_branch
          %2534 = sbr.rel (%p2532) target = $region60
        $region59: #{tpu_custom_call.1} parent=35 // pred_region
          %s2535 = smul.u32 8, %s28
          %s2537 = ssub.s32 1024, 1024
          %2538 = vsyncadd %s2528, %s2537
          %s2539 = smul.addr %s2535, 2
          %s2540 = smul.addr %s27, 32
          %s2541 = sadd.s32 %s2539, %s2540
          %s2542 = smul.addr %s2541, 64
          %s2543 = scalar_lea.hbm %s4, %s2542
          %s2544 = sshll.u32 %s2531, 4
          %s2545 = int_to_ptr.vmem [resolvable:$true] %s2544
          %2550 = dma.vmem_to_hbm [thread:$0]  %s2545, 1024, %s2543, %s2528, 64, 64, 4
        $region60: #{tpu_custom_call.1} parent=35 // pred_fallthru
          _
      $region36: #{tpu_custom_call.1} parent=5 // pred_fallthru
        _
      %p2551 = scmp.le.s32.totalorder 2, %s18
      // Predicated region
      $region61: #{tpu_custom_call.1} parent=5 // pred_check
        %p2552 = pneg %p2551
      $region62: #{tpu_custom_call.1} parent=5 // pred_check_branch
        %2554 = sbr.rel (%p2552) target = $region64
      $region63: #{tpu_custom_call.1} parent=5 // pred_region
        %s2555 = ssub.s32 %s18, 2
        // Predicated region
        $region65: #{tpu_custom_call.1} parent=63 // pred_check
          %p2556 = pneg %p150
        $region66: #{tpu_custom_call.1} parent=63 // pred_check_branch
          %2558 = sbr.rel (%p2556) target = $region68
        $region67: #{tpu_custom_call.1} parent=63 // pred_region
          %s2559 = sand.u32 %s135, 1
          %s2560 = scalar_lea.sflag [#allocation5], %s2559
          %s2561 = sand.u32 %s135, 1
          %s2562 = smul.addr %s2561, 64
          %s2563 = scalar_lea.vmem [#allocation11], %s2562
          %2564 = dma.done %s2560, 1024
        $region68: #{tpu_custom_call.1} parent=63 // pred_fallthru
          _
      $region64: #{tpu_custom_call.1} parent=5 // pred_fallthru
        _
    $region6: #{tpu_custom_call.1} parent=1 // loop_footer
      %s22 = sadd.s32 1, %s18
    $region7: #{tpu_custom_call.1} parent=1 // loop_footer_branch
      %17 = sbr.rel target = $region3
    $region8: #{tpu_custom_call.1} parent=1 // loop_exit
      _
    %2565 = vsyncpa [#allocation4], 1
    %s2566 = scalar_lea.sflag [#allocation4], 1
    %2567 = vsyncpa %s2566, 1
    %2568 = vsyncpa [#allocation7], 1
    %2569 = vsyncpa [#allocation10], 1
    %2570 = vsyncpa [#allocation5], 1
    %s2571 = scalar_lea.sflag [#allocation5], 1
    %2572 = vsyncpa %s2571, 1

</llo_original>
